<compile_context>
chip_gen: v7x
topology: tpu7x:2x2x1
jax: 0.10.0
libtpu: 0.0.40
codegen_flags: <defaults>
</compile_context>

<pallas_src>
import numpy as np
import jax
import jax.numpy as jnp
from jax import lax
from jax.experimental import pallas as pl
from jax.experimental.pallas import tpu as pltpu


_TARGET_OUT_TILE_BYTES = 4 << 20   # ~4 MiB out tile amortizes ~0.35 us/step overhead
_VMEM_TILE_BUDGET = 20 << 20       # live tiles stay well under v7x's scoped VMEM
_VMEM_LIMIT_BYTES = 32 << 20       # safe on v5e/v6e (128 MiB phys) and v7x (64 MiB phys)


def _round_up(a, b):
    return ((a + b - 1) // b) * b


def _fourier_kernel(x_ref, w_ref, o_ref):
    # x_ref: (K, tm) f32  -- transposed inputs, ones row folded in, zero-padded rows
    # w_ref: (K, P)  f32  -- [(2*pi*B).T | (2*pi*B).T] with phase row [0 | pi/2]
    # o_ref: (tm, P)
    # One MXU matmul contracting the K sublane dim of both operands
    # (same TN dot_general pattern as the flash-attention backward kernels).
    proj = lax.dot_general(
        x_ref[...], w_ref[...],
        dimension_numbers=(((0,), (0,)), ((), ())),
        preferred_element_type=jnp.float32,
    )
    # One full-lane-width EUP transcendental:
    #   cols [0, M)  -> phase 0    -> sin(2*pi*x @ B.T)
    #   cols [M, 2M) -> phase pi/2 -> cos(2*pi*x @ B.T)
    o_ref[...] = jnp.sin(proj).astype(o_ref.dtype)


def _pick_tile(N, P, K):
    """Pick row tile tm (multiple of 128) and grid size g."""
    n128 = _round_up(max(N, 1), 128)
    target_tm = max(128, (_TARGET_OUT_TILE_BYTES // (4 * P)) // 128 * 128)
    g = max(1, -(-n128 // target_tm))          # cdiv
    if n128 >= 256:
        g = max(g, 2)                          # >=2 steps: v7x megacore + pipelining
    while True:
        tm = _round_up(-(-n128 // g), 128)
        # double-buffered out + double-buffered x + resident W
        vmem = 4 * (2 * tm * P + 2 * K * tm + K * P)
        if vmem <= _VMEM_TILE_BUDGET or tm == 128:
            break
        g += 1
    return tm, g


def fourier_mapping(x, B, *, out_dtype=jnp.float32):
    """x: (..., d_in), B: (M, d_in) -> (..., 2*M)."""
    orig_shape = x.shape
    d_in = int(orig_shape[-1])
    B = jnp.asarray(B, jnp.float32)
    M = int(B.shape[0])

    xf = x.reshape(-1, d_in).astype(jnp.float32)
    N = xf.shape[0]

    # Contraction depth: d_in rows + 1 ones row (carries the phase), padded
    # with zero rows up to a full sublane tile.
    K = _round_up(d_in + 1, 8)
    P = _round_up(2 * M, 128)                  # lane-dense output width

    # ---- fold 2*pi, the transpose, the sin/cos split and the phase into W --
    two_pi_bt = (2.0 * np.pi) * B.T                                  # (d_in, M)
    w = jnp.concatenate([two_pi_bt, two_pi_bt], axis=1)              # (d_in, 2M)
    phase = jnp.concatenate(
        [jnp.zeros((1, M), jnp.float32),
         jnp.full((1, M), 0.5 * np.pi, jnp.float32)], axis=1)        # (1, 2M)
    w_aug = jnp.concatenate(
        [w, phase, jnp.zeros((K - d_in - 1, 2 * M), jnp.float32)], axis=0)
    if P > 2 * M:
        w_aug = jnp.pad(w_aug, ((0, 0), (0, P - 2 * M)))             # (K, P)

    # ---- transposed, lane-dense x with the ones row appended ---------------
    x_rows = [xf.T, jnp.ones((1, N), jnp.float32)]
    if K > d_in + 1:
        x_rows.append(jnp.zeros((K - d_in - 1, N), jnp.float32))
    x_aug = jnp.concatenate(x_rows, axis=0)                          # (K, N)

    tm, g = _pick_tile(N, P, K)
    n_pad = tm * g
    if n_pad > N:
        x_aug = jnp.pad(x_aug, ((0, 0), (0, n_pad - N)))

    out_itemsize = jnp.dtype(out_dtype).itemsize
    cost = pl.CostEstimate(
        flops=2 * n_pad * K * P,
        transcendentals=n_pad * P,
        bytes_accessed=4 * (K * n_pad + K * P) + n_pad * P * out_itemsize,
    )

    out = pl.pallas_call(
        _fourier_kernel,
        out_shape=jax.ShapeDtypeStruct((n_pad, P), out_dtype),
        grid_spec=pltpu.PrefetchScalarGridSpec(
            num_scalar_prefetch=0,
            grid=(g,),
            in_specs=[
                # streamed row tile of transposed x: one contiguous DMA per row
                pl.BlockSpec((K, tm), lambda i: (0, i)),
                # tiny constant weight, resident every grid step
                pl.BlockSpec((K, P), lambda i: (0, 0)),
            ],
            out_specs=pl.BlockSpec((tm, P), lambda i: (i, 0)),
        ),
        compiler_params=pltpu.CompilerParams(
            dimension_semantics=("parallel",),
            vmem_limit_bytes=_VMEM_LIMIT_BYTES,
        ),
        cost_estimate=cost,
    )(x_aug, w_aug)

    # Only unpad when padding actually happened (avoids an extra full HBM
    # read+write of the dominant output stream in the aligned case).
    if n_pad != N or P != 2 * M:
        out = out[:N, :2 * M]
    return out.reshape(*orig_shape[:-1], 2 * M)


def make_B(dims, seed):
    # Same values as `np.random.seed(seed); np.random.randn(*dims) * 10`
    # (the PyTorch module's init) but without mutating global NumPy RNG state.
    rs = np.random.RandomState(seed)
    return jnp.asarray(rs.randn(*dims) * 10.0, dtype=jnp.float32)


if __name__ == "__main__":
    batch, npts, d_in, mapping_size = 2, 128, 4, 64

    key = jax.random.PRNGKey(0)
    x = jax.random.normal(key, (batch, npts, d_in), dtype=jnp.float32)
    B = make_B((mapping_size, d_in), seed=0)

    y = jax.block_until_ready(fourier_mapping(x, B))

    # pure-numpy reference of the PyTorch semantics
    proj = 2.0 * np.pi * (np.asarray(x).reshape(-1, d_in) @ np.asarray(B).T)
    ref = np.concatenate([np.sin(proj), np.cos(proj)], axis=-1).reshape(
        batch, npts, 2 * mapping_size)

    assert y.shape == (batch, npts, 2 * mapping_size)
    # cos(z) computed as sin(z + pi/2) at |z| up to a few hundred -> allow a
    # little f32 range-reduction slack vs native sin/cos.
    err = np.abs(np.asarray(y) - ref).max()
    assert np.allclose(np.asarray(y), ref, atol=1e-3, rtol=1e-3), err

    print("KERNEL_OK")
</pallas_src>

<mosaic_0001>
module attributes {stable_mosaic.version = 11 : i64} {
  func.func @_fourier_kernel(%arg0: i32, %arg1: memref<8x128xf32, #tpu.memory_space<vmem>>, %arg2: memref<8x128xf32, #tpu.memory_space<vmem>>, %arg3: memref<128x128xf32, #tpu.memory_space<vmem>>) attributes {dimension_semantics = [#tpu.dimension_semantics<parallel>], iteration_bounds = array<i64: 2>, scalar_prefetch = 0 : i64, scratch_operands = 0 : i64, tpu.core_type = #tpu.core_type<tc>, window_params = [{transform_indices = @transform_0, window_bounds = array<i64: 8, 128>}, {pipeline_mode = #tpu.pipeline_mode<synchronous>, transform_indices = @transform_1, window_bounds = array<i64: 8, 128>}, {transform_indices = @transform_2, window_bounds = array<i64: 128, 128>}]} {
    %c0 = arith.constant 0 : index
    %c0_0 = arith.constant 0 : index
    %0 = vector.load %arg1[%c0, %c0_0] : memref<8x128xf32, #tpu.memory_space<vmem>>, vector<8x128xf32>
    %c0_1 = arith.constant 0 : index
    %c0_2 = arith.constant 0 : index
    %1 = vector.load %arg2[%c0_1, %c0_2] : memref<8x128xf32, #tpu.memory_space<vmem>>, vector<8x128xf32>
    %cst = arith.constant dense<0.000000e+00> : vector<128x128xf32>
    %2 = tpu.matmul %0, %1, %cst {dimension_numbers = #tpu.dot_dimension_numbers<[0], [0], [1], [1], [0, 1, 1, 1], [], []>} : vector<8x128xf32>, vector<8x128xf32>, vector<128x128xf32> -> vector<128x128xf32>
    %3 = math.sin %2 : vector<128x128xf32>
    %c0_3 = arith.constant 0 : index
    %c0_4 = arith.constant 0 : index
    %4 = vector.load %arg3[%c0_3, %c0_4] : memref<128x128xf32, #tpu.memory_space<vmem>>, vector<128x128xf32>
    tpu.vector_store %arg3[%c0_3, %c0_4], %3 {strides = array<i32>} : memref<128x128xf32, #tpu.memory_space<vmem>>, vector<128x128xf32>,
    return
  }
  func.func @transform_0(%arg0: i32) -> (i32, i32) {
    %c0_i32 = arith.constant 0 : i32
    %c0_i32_0 = arith.constant 0 : i32
    return %c0_i32, %arg0 : i32, i32
  }
  func.func @transform_1(%arg0: i32) -> (i32, i32) {
    %c0_i32 = arith.constant 0 : i32
    %c0_i32_0 = arith.constant 0 : i32
    %c0_i32_1 = arith.constant 0 : i32
    return %c0_i32, %c0_i32_0 : i32, i32
  }
  func.func @transform_2(%arg0: i32) -> (i32, i32) {
    %c0_i32 = arith.constant 0 : i32
    %c0_i32_0 = arith.constant 0 : i32
    return %arg0, %c0_i32 : i32, i32
  }
}

</mosaic_0001>

<llo_original>
// kernel: tpu_custom_call.1
$region0: #{tpu_custom_call.1}
  #allocation0 [shape = 'u32[]', space=smem, size = 0x4, offset = 0x4, fixed_abs, tag = 'smem constant byte address 0x4 - core index']
  #allocation1 [shape = 'u32[144,128]{1,0:T(1,128)}', space=vmem, size = 0x12000, scoped, tag = 'internal scratch']
  %s0 = inlined_call_operand.hbm [shape: f32[8,256], index: 0, kind: input, shape index: {}]
  %s1 = inlined_call_operand.hbm [shape: f32[8,128], index: 1, kind: input, shape index: {}]
  %s2 = inlined_call_operand.hbm [shape: f32[256,128], index: 2, kind: output, shape index: {}]
  %s3 = sld [smem:[#allocation0]]
  $region49: #{tpu_custom_call.1} parent=0
    _
  %s5 = ssub.s32 1, %s3
  %s6 = scalar_select 0, %s5, %s3
  $region1: #{tpu_custom_call.1} parent=0
    #allocation2 [shape = 'u8[8192]{0}', space=vmem, size = 0x2000, scoped, tag = 'input window, operand 0']
    #allocation3 [shape = 's32[2]{0}', space=sflag, size = 0x8, scoped, tag = 'scoped memory for tpu_custom_call.1']
    #allocation4 [shape = 's32[2]{0}', space=sflag, size = 0x8, scoped, tag = 'scoped memory for tpu_custom_call.1']
    #allocation5 [shape = 'u8[4096]{0}', space=vmem, size = 0x1000, scoped, tag = 'input window, operand 1, single buffered']
    #allocation6 [shape = 's32[1]{0}', space=sflag, size = 0x4, scoped, tag = 'scoped memory for tpu_custom_call.1']
    #allocation7 [shape = 'u8[131072]{0}', space=vmem, size = 0x20000, scoped, tag = 'output window, operand 0']
    %7 = vsyncpa [#allocation3], 0
    %s8 = scalar_lea.sflag [#allocation3], 1
    %9 = vsyncpa %s8, 0
    %10 = vsyncpa [#allocation6], 0
    %11 = vsyncpa [#allocation4], 0
    %s12 = scalar_lea.sflag [#allocation4], 1
    %13 = vsyncpa %s12, 0
    loop: start=0, step=1, limit=4
    $region2: #{tpu_custom_call.1} parent=1 // loop_pre_header
      _
    $region3: #{tpu_custom_call.1} parent=1 // loop_header
      %s15 = sphi 0, %s19
      %p16 = scmp.ge.s32.totalorder %s15, 4
      %s25 = sphi 0, %s27
      %s28 = sphi 0, %s25
      %s29 = sphi 0, %s28
      %s45 = sphi 0, %s29
      %s49 = sphi 0, %s49
      %s51 = sphi 0, %s49
      %s52 = sphi 0, %s51
      %s66 = sphi 0, %s52
      %s72 = sphi 0, %s74
      %s75 = sphi 0, %s72
      %s76 = sphi 0, %s75
      %s92 = sphi 0, %s76
    $region4: #{tpu_custom_call.1} parent=1 // loop_header_branch
      %18 = sbr.rel (%p16) target = $region8
    $region5: #{tpu_custom_call.1} parent=1 // loop_body
      %s20 = ssub.s32 %s15, 1
      %s21 = ssub.s32 %s15, 2
      %s22 = sadd.s32 %s15, 1
      %s23 = ssub.s32 %s15, %s22
      %p24 = scmp.eq.s32.totalorder %s23, 0
      %s26 = sadd.s32 %s25, 1
      %s27 = scalar_select %p24, %s25, %s26
      %p30 = pneg %p24
      %p31 = scmp.eq.s32.totalorder %s15, 1
      %p32 = por %p30, %p31
      %p33 = scmp.ne.s32.totalorder %s25, %s28
      %p34 = scmp.eq.s32.totalorder %s15, 0
      %p35 = por %p33, %p34
      %p36 = scmp.ne.s32.totalorder %s25, %s28
      %p37 = scmp.eq.s32.totalorder %s20, 1
      %p38 = por %p36, %p37
      %p39 = scmp.ne.s32.totalorder %s28, %s29
      %p40 = scmp.eq.s32.totalorder %s20, 0
      %p41 = por %p39, %p40
      %p42 = scmp.ne.s32.totalorder %s28, %s29
      %p43 = scmp.eq.s32.totalorder %s21, 1
      %p44 = por %p42, %p43
      %p46 = scmp.ne.s32.totalorder %s29, %s45
      %p47 = scmp.eq.s32.totalorder %s21, 0
      %p48 = por %p46, %p47
      %s50 = sadd.s32 %s49, 1
      %p53 = scmp.eq.s32.totalorder %s15, 1
      %p54 = scmp.ne.s32.totalorder %s49, %s51
      %p55 = scmp.eq.s32.totalorder %s15, 0
      %p56 = por %p54, %p55
      %p57 = scmp.ne.s32.totalorder %s49, %s51
      %p58 = scmp.eq.s32.totalorder %s20, 1
      %p59 = por %p57, %p58
      %p60 = scmp.ne.s32.totalorder %s51, %s52
      %p61 = scmp.eq.s32.totalorder %s20, 0
      %p62 = por %p60, %p61
      %p63 = scmp.ne.s32.totalorder %s51, %s52
      %p64 = scmp.eq.s32.totalorder %s21, 1
      %p65 = por %p63, %p64
      %p67 = scmp.ne.s32.totalorder %s52, %s66
      %p68 = scmp.eq.s32.totalorder %s21, 0
      %p69 = por %p67, %p68
      %s70 = ssub.s32 %s15, %s22
      %p71 = scmp.eq.s32.totalorder %s70, 0
      %s73 = sadd.s32 %s72, 1
      %s74 = scalar_select %p71, %s72, %s73
      %p77 = pneg %p71
      %p78 = scmp.eq.s32.totalorder %s15, 1
      %p79 = por %p77, %p78
      %p80 = scmp.ne.s32.totalorder %s72, %s75
      %p81 = scmp.eq.s32.totalorder %s15, 0
      %p82 = por %p80, %p81
      %p83 = scmp.ne.s32.totalorder %s72, %s75
      %p84 = scmp.eq.s32.totalorder %s20, 1
      %p85 = por %p83, %p84
      %p86 = scmp.ne.s32.totalorder %s75, %s76
      %p87 = scmp.eq.s32.totalorder %s20, 0
      %p88 = por %p86, %p87
      %p89 = scmp.ne.s32.totalorder %s75, %s76
      %p90 = scmp.eq.s32.totalorder %s21, 1
      %p91 = por %p89, %p90
      %p93 = scmp.ne.s32.totalorder %s76, %s92
      %p94 = scmp.eq.s32.totalorder %s21, 0
      %p95 = por %p93, %p94
      %p96 = scmp.le.s32.totalorder 1, %s15
      %p97 = scmp.lt.s32.totalorder %s15, 3
      %p98 = pnand %p96, %p97
      %p99 = pneg %p98
      // Predicated region
      $region9: #{tpu_custom_call.1} parent=5 // pred_check
        _
      $region10: #{tpu_custom_call.1} parent=5 // pred_check_branch
        %101 = sbr.rel (%p98) target = $region12
      $region11: #{tpu_custom_call.1} parent=5 // pred_region
        %s102 = ssub.s32 %s15, 1
        // Predicated region
        $region13: #{tpu_custom_call.1} parent=11 // pred_check
          %p103 = pneg %p62
        $region14: #{tpu_custom_call.1} parent=11 // pred_check_branch
          %105 = sbr.rel (%p103) target = $region16
        $region15: #{tpu_custom_call.1} parent=11 // pred_region
          %s107 = ssub.s32 128, 128
          %108 = vsyncadd [#allocation6], %s107
          %s110 = sshll.u32 [#allocation5], 4
          %s111 = int_to_ptr.vmem [resolvable:$true] %s110
          %113 = dma.hbm_to_vmem [thread:$0]  %s1, 128, %s111, [#allocation6]
        $region16: #{tpu_custom_call.1} parent=11 // pred_fallthru
          _
      $region12: #{tpu_custom_call.1} parent=5 // pred_fallthru
        _
      %p114 = scmp.lt.s32.totalorder %s15, 2
      // Predicated region
      $region17: #{tpu_custom_call.1} parent=5 // pred_check
        %p115 = pneg %p114
      $region18: #{tpu_custom_call.1} parent=5 // pred_check_branch
        %117 = sbr.rel (%p115) target = $region20
      $region19: #{tpu_custom_call.1} parent=5 // pred_region
        // Predicated region
        $region21: #{tpu_custom_call.1} parent=19 // pred_check
          %p118 = pneg %p35
        $region22: #{tpu_custom_call.1} parent=19 // pred_check_branch
          %120 = sbr.rel (%p118) target = $region24
        $region23: #{tpu_custom_call.1} parent=19 // pred_region
          %s121 = sand.u32 %s25, 1
          %s122 = scalar_lea.sflag [#allocation3], %s121
          %s123 = sand.u32 %s25, 1
          %s124 = smul.addr %s123, 8
          %s125 = scalar_lea.vmem [#allocation2], %s124
          %s127 = ssub.s32 128, 128
          %128 = vsyncadd %s122, %s127
          %s129 = smul.addr %s15, 128
          %s130 = scalar_lea.hbm %s0, %s129
          %s132 = sshll.u32 %s125, 4
          %s133 = int_to_ptr.vmem [resolvable:$true] %s132
          %135 = dma.hbm_to_vmem [thread:$0]  %s130, 128, %s133, %s122
        $region24: #{tpu_custom_call.1} parent=19 // pred_fallthru
          _
      $region20: #{tpu_custom_call.1} parent=5 // pred_fallthru
        _
      %p136 = scmp.le.s32.totalorder 1, %s15
      %p137 = scmp.lt.s32.totalorder %s15, 3
      %p138 = pnand %p136, %p137
      %p139 = pneg %p138
      // Predicated region
      $region25: #{tpu_custom_call.1} parent=5 // pred_check
        _
      $region26: #{tpu_custom_call.1} parent=5 // pred_check_branch
        %141 = sbr.rel (%p138) target = $region28
      $region27: #{tpu_custom_call.1} parent=5 // pred_region
        %s142 = ssub.s32 %s15, 1
        %s143 = sand.u32 %s28, 1
        %s144 = scalar_lea.sflag [#allocation3], %s143
        %s145 = sand.u32 %s28, 1
        %s146 = smul.addr %s145, 8
        %s147 = scalar_lea.vmem [#allocation2], %s146
        // Predicated region
        $region29: #{tpu_custom_call.1} parent=27 // pred_check
          %p148 = pneg %p41
        $region30: #{tpu_custom_call.1} parent=27 // pred_check_branch
          %150 = sbr.rel (%p148) target = $region32
        $region31: #{tpu_custom_call.1} parent=27 // pred_region
          %151 = dma.done %s144, 128
        $region32: #{tpu_custom_call.1} parent=27 // pred_fallthru
          _
        // Predicated region
        $region33: #{tpu_custom_call.1} parent=27 // pred_check
          %p152 = pneg %p62
        $region34: #{tpu_custom_call.1} parent=27 // pred_check_branch
          %154 = sbr.rel (%p152) target = $region36
        $region35: #{tpu_custom_call.1} parent=27 // pred_region
          %155 = dma.done [#allocation6], 128
        $region36: #{tpu_custom_call.1} parent=27 // pred_fallthru
          _
        %s156 = sand.u32 %s28, 1
        %s157 = scalar_lea.sflag [#allocation3], %s156
        %s158 = sand.u32 %s28, 1
        %s159 = smul.addr %s158, 8
        %s160 = scalar_lea.vmem [#allocation2], %s159
        %p161 = pneg %p41
        %p162 = pneg %p38
        %p163 = pneg %p62
        %p164 = pneg %p59
        %p165 = pneg %p88
        %p166 = pneg %p85
        %s167 = sand.u32 %s75, 1
        %s168 = scalar_lea.sflag [#allocation4], %s167
        %s169 = sand.u32 %s75, 1
        %s170 = smul.addr %s169, 128
        %s171 = scalar_lea.vmem [#allocation7], %s170
        %s172 = smul.u32 16, %s20
        %v173 = vld [vmem:[%s147] sm:$0xff]
        %v174 = vld [vmem:[#allocation5] sm:$0xff]
        %175 = vxpose.xlu0.b32.start [1/16] %v173, 128
        %176 = vxpose.xlu0.b32.cont [2/16] 0.0, 128
        %177 = vxpose.xlu0.b32.cont [3/16] 0.0, 128
        %178 = vxpose.xlu0.b32.cont [4/16] 0.0, 128
        %179 = vxpose.xlu0.b32.cont [5/16] 0.0, 128
        %180 = vxpose.xlu0.b32.cont [6/16] 0.0, 128
        %181 = vxpose.xlu0.b32.cont [7/16] 0.0, 128
        %182 = vxpose.xlu0.b32.cont [8/16] 0.0, 128
        %183 = vxpose.xlu0.b32.cont [9/16] 0.0, 128
        %184 = vxpose.xlu0.b32.cont [10/16] 0.0, 128
        %185 = vxpose.xlu0.b32.cont [11/16] 0.0, 128
        %186 = vxpose.xlu0.b32.cont [12/16] 0.0, 128
        %187 = vxpose.xlu0.b32.cont [13/16] 0.0, 128
        %188 = vxpose.xlu0.b32.cont [14/16] 0.0, 128
        %189 = vxpose.xlu0.b32.cont [15/16] 0.0, 128
        %190 = vxpose.xlu0.b32.end [16/16] 0.0, 128
        %v191 = vpop.trf.xlu0
        %v192 = vpop.trf.xlu0
        %v193 = vpop.trf.xlu0
        %v194 = vpop.trf.xlu0
        %v195 = vpop.trf.xlu0
        %v196 = vpop.trf.xlu0
        %v197 = vpop.trf.xlu0
        %v198 = vpop.trf.xlu0
        %v199 = vpop.trf.xlu0
        %v200 = vpop.trf.xlu0
        %v201 = vpop.trf.xlu0
        %v202 = vpop.trf.xlu0
        %v203 = vpop.trf.xlu0
        %v204 = vpop.trf.xlu0
        %v205 = vpop.trf.xlu0
        %v206 = vpop.trf.xlu0
        %vm207 = vcmask 64512
        %v209 = vsel %vm207, %v191, 0
        %v212 = vsel %vm207, %v192, 0
        %v215 = vsel %vm207, %v193, 0
        %v218 = vsel %vm207, %v194, 0
        %v221 = vsel %vm207, %v195, 0
        %v224 = vsel %vm207, %v196, 0
        %v227 = vsel %vm207, %v197, 0
        %v230 = vsel %vm207, %v198, 0
        %v233 = vsel %vm207, %v199, 0
        %v236 = vsel %vm207, %v200, 0
        %v239 = vsel %vm207, %v201, 0
        %v242 = vsel %vm207, %v202, 0
        %v245 = vsel %vm207, %v203, 0
        %v248 = vsel %vm207, %v204, 0
        %v251 = vsel %vm207, %v205, 0
        %v254 = vsel %vm207, %v206, 0
        %256 = vmatprep.subr.mxu0 0.0
        %257 = vmatpush1.msra.mxu0 %v174
        %258 = vmatprep.subr.mxu0 0.0
        %259 = vmatpush1.msra.mxu0 0.0
        %260 = vmatprep.subr.mxu0 0.0
        %261 = vmatpush1.msra.mxu0 0.0
        %262 = vmatprep.subr.mxu0 0.0
        %263 = vmatpush1.msra.mxu0 0.0
        %264 = vmatprep.subr.mxu0 0.0
        %265 = vmatpush1.msra.mxu0 0.0
        %266 = vmatprep.subr.mxu0 0.0
        %267 = vmatpush1.msra.mxu0 0.0
        %268 = vmatprep.subr.mxu0 0.0
        %269 = vmatpush1.msra.mxu0 0.0
        %270 = vmatprep.subr.mxu0 0.0
        %271 = vmatpush1.msra.mxu0 0.0
        %272 = vmatprep.subr.mxu0 0.0
        %273 = vmatpush1.msra.mxu0 0.0
        %274 = vmatprep.subr.mxu0 0.0
        %275 = vmatpush1.msra.mxu0 0.0
        %276 = vmatprep.subr.mxu0 0.0
        %277 = vmatpush1.msra.mxu0 0.0
        %278 = vmatprep.subr.mxu0 0.0
        %279 = vmatpush1.msra.mxu0 0.0
        %280 = vmatprep.subr.mxu0 0.0
        %281 = vmatpush1.msra.mxu0 0.0
        %282 = vmatprep.subr.mxu0 0.0
        %283 = vmatpush1.msra.mxu0 0.0
        %284 = vmatprep.subr.mxu0 0.0
        %285 = vmatpush1.msra.mxu0 0.0
        %286 = vmatprep.subr.mxu0 0.0
        %287 = vmatpush1.msra.mxu0 0.0
        %288 = vmatprep.subr.mxu0 0.0
        %289 = vmatpush1.msra.mxu0 0.0
        %290 = vmatprep.subr.mxu0 0.0
        %291 = vmatpush1.msra.mxu0 0.0
        %292 = vmatprep.subr.mxu0 0.0
        %293 = vmatpush1.msra.mxu0 0.0
        %294 = vmatprep.subr.mxu0 0.0
        %295 = vmatpush1.msra.mxu0 0.0
        %296 = vmatprep.subr.mxu0 0.0
        %297 = vmatpush1.msra.mxu0 0.0
        %298 = vmatprep.subr.mxu0 0.0
        %299 = vmatpush1.msra.mxu0 0.0
        %300 = vmatprep.subr.mxu0 0.0
        %301 = vmatpush1.msra.mxu0 0.0
        %302 = vmatprep.subr.mxu0 0.0
        %303 = vmatpush1.msra.mxu0 0.0
        %304 = vmatprep.subr.mxu0 0.0
        %305 = vmatpush1.msra.mxu0 0.0
        %306 = vmatprep.subr.mxu0 0.0
        %307 = vmatpush1.msra.mxu0 0.0
        %308 = vmatprep.subr.mxu0 0.0
        %309 = vmatpush1.msra.mxu0 0.0
        %310 = vmatprep.subr.mxu0 0.0
        %311 = vmatpush1.msra.mxu0 0.0
        %312 = vmatprep.subr.mxu0 0.0
        %313 = vmatpush1.msra.mxu0 0.0
        %314 = vmatprep.subr.mxu0 0.0
        %315 = vmatpush1.msra.mxu0 0.0
        %316 = vmatprep.subr.mxu0 0.0
        %317 = vmatpush1.msra.mxu0 0.0
        %318 = vmatprep.subr.mxu0 0.0
        %319 = vmatpush1.msra.mxu0 0.0
        %320 = vmatprep.mubr.f32.mxu0 0.0
        %321 = vmatmul.mubr.f32.gmra.mrb[0].mxu0 %v209
        %v322 = vpop.f32.mrb[0].mxu0
        %v323 = vadd.f32 0.0, %v322
        %v324 = vpop.f32.mrb[0].mxu0
        %325 = vmatprep.mubr.f32.mxu0 0.0
        %326 = vmatmul.mubr.f32.gmra.mrb[0].mxu0 %v212
        %v327 = vpop.f32.mrb[0].mxu0
        %v328 = vadd.f32 0.0, %v327
        %v329 = vpop.f32.mrb[0].mxu0
        %330 = vmatprep.mubr.f32.mxu0 0.0
        %331 = vmatmul.mubr.f32.gmra.mrb[0].mxu0 %v215
        %v332 = vpop.f32.mrb[0].mxu0
        %v333 = vadd.f32 0.0, %v332
        %v334 = vpop.f32.mrb[0].mxu0
        %335 = vmatprep.mubr.f32.mxu0 0.0
        %336 = vmatmul.mubr.f32.gmra.mrb[0].mxu0 %v218
        %v337 = vpop.f32.mrb[0].mxu0
        %v338 = vadd.f32 0.0, %v337
        %v339 = vpop.f32.mrb[0].mxu0
        %340 = vmatprep.mubr.f32.mxu0 0.0
        %341 = vmatmul.mubr.f32.gmra.mrb[0].mxu0 %v221
        %v342 = vpop.f32.mrb[0].mxu0
        %v343 = vadd.f32 0.0, %v342
        %v344 = vpop.f32.mrb[0].mxu0
        %345 = vmatprep.mubr.f32.mxu0 0.0
        %346 = vmatmul.mubr.f32.gmra.mrb[0].mxu0 %v224
        %v347 = vpop.f32.mrb[0].mxu0
        %v348 = vadd.f32 0.0, %v347
        %v349 = vpop.f32.mrb[0].mxu0
        %350 = vmatprep.mubr.f32.mxu0 0.0
        %351 = vmatmul.mubr.f32.gmra.mrb[0].mxu0 %v227
        %v352 = vpop.f32.mrb[0].mxu0
        %v353 = vadd.f32 0.0, %v352
        %v354 = vpop.f32.mrb[0].mxu0
        %355 = vmatprep.mubr.f32.mxu0 0.0
        %356 = vmatmul.mubr.f32.gmra.mrb[0].mxu0 %v230
        %v357 = vpop.f32.mrb[0].mxu0
        %v358 = vadd.f32 0.0, %v357
        %v359 = vpop.f32.mrb[0].mxu0
        %360 = vmatprep.mubr.f32.mxu0 0.0
        %361 = vmatmul.mubr.f32.gmra.mrb[0].mxu0 %v233
        %v362 = vpop.f32.mrb[0].mxu0
        %v363 = vadd.f32 0.0, %v362
        %v364 = vpop.f32.mrb[0].mxu0
        %365 = vmatprep.mubr.f32.mxu0 0.0
        %366 = vmatmul.mubr.f32.gmra.mrb[0].mxu0 %v236
        %v367 = vpop.f32.mrb[0].mxu0
        %v368 = vadd.f32 0.0, %v367
        %v369 = vpop.f32.mrb[0].mxu0
        %370 = vmatprep.mubr.f32.mxu0 0.0
        %371 = vmatmul.mubr.f32.gmra.mrb[0].mxu0 %v239
        %v372 = vpop.f32.mrb[0].mxu0
        %v373 = vadd.f32 0.0, %v372
        %v374 = vpop.f32.mrb[0].mxu0
        %375 = vmatprep.mubr.f32.mxu0 0.0
        %376 = vmatmul.mubr.f32.gmra.mrb[0].mxu0 %v242
        %v377 = vpop.f32.mrb[0].mxu0
        %v378 = vadd.f32 0.0, %v377
        %v379 = vpop.f32.mrb[0].mxu0
        %380 = vmatprep.mubr.f32.mxu0 0.0
        %381 = vmatmul.mubr.f32.gmra.mrb[0].mxu0 %v245
        %v382 = vpop.f32.mrb[0].mxu0
        %v383 = vadd.f32 0.0, %v382
        %v384 = vpop.f32.mrb[0].mxu0
        %385 = vmatprep.mubr.f32.mxu0 0.0
        %386 = vmatmul.mubr.f32.gmra.mrb[0].mxu0 %v248
        %v387 = vpop.f32.mrb[0].mxu0
        %v388 = vadd.f32 0.0, %v387
        %v389 = vpop.f32.mrb[0].mxu0
        %390 = vmatprep.mubr.f32.mxu0 0.0
        %391 = vmatmul.mubr.f32.gmra.mrb[0].mxu0 %v251
        %v392 = vpop.f32.mrb[0].mxu0
        %v393 = vadd.f32 0.0, %v392
        %v394 = vpop.f32.mrb[0].mxu0
        %395 = vmatprep.mubr.f32.mxu0 0.0
        %396 = vmatmul.mubr.f32.gmra.mrb[0].mxu0 %v254
        %v397 = vpop.f32.mrb[0].mxu0
        %v398 = vadd.f32 0.0, %v397
        %v399 = vpop.f32.mrb[0].mxu0
        %400 = vdwg.mxu0
        %v401 = vand.u32 2147483647, %v323
        %vm402 = vcmp.le.f32.partialorder %v401, 0.7853982
        %vm403 = vcmp.lt.s32.totalorder %v323, 0
        %v404 = vand.u32 %v323, 2139095040
        %v405 = vshrl.u32 %v404, 23
        %v406 = vsub.s32 %v405, 127
        %v407 = vand.u32 2147483647, %v323
        %v408 = vand.u32 %v407, 8388607
        %v409 = vor.u32 %v408, 8388608
        %v410 = vsub.s32 0, %v409
        %v411 = vadd.s32 %v406, 1
        %vm412 = vcmp.gt.s32.totalorder %v411, 0
        %v413 = vsel %vm412, %v411, 0
        %v414 = vshrl.u32 %v413, 5
        %v415 = vand.u32 %v413, 31
        %v416 = vsub.s32 32, %v415
        %v417 = vshrl.u32 683565275, %v416
        %v418 = vshll.u32 683565275, %v415
        %v419 = vshrl.u32 2475754826, %v416
        %v420 = vor.u32 %v418, %v419
        %v421 = vshll.u32 2475754826, %v415
        %v422 = vshrl.u32 2131351028, %v416
        %v423 = vor.u32 %v421, %v422
        %v424 = vshll.u32 2131351028, %v415
        %v425 = vshrl.u32 2102212464, %v416
        %v426 = vor.u32 %v424, %v425
        %v427 = vshll.u32 2102212464, %v415
        %v428 = vshrl.u32 920167782, %v416
        %v429 = vor.u32 %v427, %v428
        %v430 = vshll.u32 920167782, %v415
        %v431 = vshrl.u32 1326507024, %v416
        %v432 = vor.u32 %v430, %v431
        %vm433 = vcmp.lt.s32.totalorder %v414, 1
        %vm434 = vcmp.lt.s32.totalorder %v414, 2
        %vm435 = vcmp.lt.s32.totalorder %v414, 3
        %vm436 = vcmp.lt.s32.totalorder %v414, 4
        %v437 = vsel %vm433, %v417, %v420
        %v438 = vsel %vm436, %v426, 2102212464
        %v439 = vsel %vm435, %v423, %v438
        %v440 = vsel %vm434, %v437, %v439
        %v441 = vsel %vm433, %v420, %v423
        %v442 = vsel %vm436, %v429, 920167782
        %v443 = vsel %vm435, %v426, %v442
        %v444 = vsel %vm434, %v441, %v443
        %v445 = vsel %vm433, %v423, %v426
        %v446 = vsel %vm436, %v432, 1326507024
        %v447 = vsel %vm435, %v429, %v446
        %v448 = vsel %vm434, %v445, %v447
        %v449 = vshll.u32 %v409, 8
        %v450 = vmul.u32.u64.compose %v449, %v448
        %v451 = vextract.low.u32 %v450
        %v452 = vextract.high.u32 %v450
        %v453 = vmul.u32.u64.compose %v449, %v444
        %v454 = vextract.low.u32 %v453
        %v455 = vextract.high.u32 %v453
        %v456 = vmul.u32 %v449, %v440
        %v457 = vadd.s32 %v452, %v454
        %vm458 = vc.u32 %v452, %v454
        %v459 = vadd.s32 %v455, 1
        %v460 = vsel %vm458, %v459, %v455
        %v461 = vadd.s32 %v456, %v460
        %v462 = vadd.s32 %v461, 536870912
        %v463 = vshrl.u32 %v462, 30
        %v464 = vshll.u32 %v463, 30
        %v465 = vsub.s32 %v461, %v464
        %vm466 = vcmp.lt.s32.totalorder %v465, 0
        %v467 = vsub.s32 0, %v465
        %v468 = vsel %vm466, %v467, %v465
        %v469 = vclz %v468
        %v470 = vsub.s32 %v469, 2
        %vm471 = vcmp.gt.s32.totalorder 0, %v470
        %v472 = vsel %vm471, 0, %v470
        %v473 = vsub.s32 32, %v472
        %v474 = vshll.u32 %v465, %v472
        %v475 = vshrl.u32 %v457, %v473
        %v476 = vor.u32 %v474, %v475
        %v477 = vsub.s32 4294967266, %v472
        %v478 = vadd.s32 %v477, 127
        %v479 = vshll.u32 %v478, 23
        %v480 = vor.u32 4788187, %v479
        %v481 = vand.u32 2147483647, %v480
        %v483 = vcvt.s32.f32 %v476
        %v484 = vmul.f32 %v483, %v481
        %v485 = vxor.u32 %v484, 2147483648
        %v486 = vsel %vm403, %v485, %v484
        %v487 = vsub.s32 4, %v463
        %v488 = vsel %vm403, %v487, %v463
        %v489 = vsel %vm402, %v323, %v486
        %v490 = vsel %vm402, 0, %v488
        %v491 = vcosq.f32.pop %v489
        %v492 = vsinq.f32.pop %v489
        %vm493 = vweird.f32 %v323
        %v494 = vadd.s32 %v490, 3
        %v495 = vand.u32 %v494, 3
        %vm496 = vcmp.lt.s32.totalorder %v495, 2
        %vm497 = vcmp.eq.s32.totalorder %v495, 0
        %v498 = vxor.u32 %v492, 2147483648
        %v499 = vsel %vm497, %v491, %v498
        %vm500 = vcmp.eq.s32.totalorder %v495, 2
        %v501 = vxor.u32 %v491, 2147483648
        %v502 = vsel %vm500, %v501, %v492
        %v503 = vsel %vm496, %v499, %v502
        %v504 = vsel %vm493, nan, %v503
        %v505 = vand.u32 2147483647, %v328
        %vm506 = vcmp.le.f32.partialorder %v505, 0.7853982
        %vm507 = vcmp.lt.s32.totalorder %v328, 0
        %v508 = vand.u32 %v328, 2139095040
        %v509 = vshrl.u32 %v508, 23
        %v510 = vsub.s32 %v509, 127
        %v511 = vand.u32 2147483647, %v328
        %v512 = vand.u32 %v511, 8388607
        %v513 = vor.u32 %v512, 8388608
        %v514 = vsub.s32 0, %v513
        %v515 = vadd.s32 %v510, 1
        %vm516 = vcmp.gt.s32.totalorder %v515, 0
        %v517 = vsel %vm516, %v515, 0
        %v518 = vshrl.u32 %v517, 5
        %v519 = vand.u32 %v517, 31
        %v520 = vsub.s32 32, %v519
        %v521 = vshrl.u32 683565275, %v520
        %v522 = vshll.u32 683565275, %v519
        %v523 = vshrl.u32 2475754826, %v520
        %v524 = vor.u32 %v522, %v523
        %v525 = vshll.u32 2475754826, %v519
        %v526 = vshrl.u32 2131351028, %v520
        %v527 = vor.u32 %v525, %v526
        %v528 = vshll.u32 2131351028, %v519
        %v529 = vshrl.u32 2102212464, %v520
        %v530 = vor.u32 %v528, %v529
        %v531 = vshll.u32 2102212464, %v519
        %v532 = vshrl.u32 920167782, %v520
        %v533 = vor.u32 %v531, %v532
        %v534 = vshll.u32 920167782, %v519
        %v535 = vshrl.u32 1326507024, %v520
        %v536 = vor.u32 %v534, %v535
        %vm537 = vcmp.lt.s32.totalorder %v518, 1
        %vm538 = vcmp.lt.s32.totalorder %v518, 2
        %vm539 = vcmp.lt.s32.totalorder %v518, 3
        %vm540 = vcmp.lt.s32.totalorder %v518, 4
        %v541 = vsel %vm537, %v521, %v524
        %v542 = vsel %vm540, %v530, 2102212464
        %v543 = vsel %vm539, %v527, %v542
        %v544 = vsel %vm538, %v541, %v543
        %v545 = vsel %vm537, %v524, %v527
        %v546 = vsel %vm540, %v533, 920167782
        %v547 = vsel %vm539, %v530, %v546
        %v548 = vsel %vm538, %v545, %v547
        %v549 = vsel %vm537, %v527, %v530
        %v550 = vsel %vm540, %v536, 1326507024
        %v551 = vsel %vm539, %v533, %v550
        %v552 = vsel %vm538, %v549, %v551
        %v553 = vshll.u32 %v513, 8
        %v554 = vmul.u32.u64.compose %v553, %v552
        %v555 = vextract.low.u32 %v554
        %v556 = vextract.high.u32 %v554
        %v557 = vmul.u32.u64.compose %v553, %v548
        %v558 = vextract.low.u32 %v557
        %v559 = vextract.high.u32 %v557
        %v560 = vmul.u32 %v553, %v544
        %v561 = vadd.s32 %v556, %v558
        %vm562 = vc.u32 %v556, %v558
        %v563 = vadd.s32 %v559, 1
        %v564 = vsel %vm562, %v563, %v559
        %v565 = vadd.s32 %v560, %v564
        %v566 = vadd.s32 %v565, 536870912
        %v567 = vshrl.u32 %v566, 30
        %v568 = vshll.u32 %v567, 30
        %v569 = vsub.s32 %v565, %v568
        %vm570 = vcmp.lt.s32.totalorder %v569, 0
        %v571 = vsub.s32 0, %v569
        %v572 = vsel %vm570, %v571, %v569
        %v573 = vclz %v572
        %v574 = vsub.s32 %v573, 2
        %vm575 = vcmp.gt.s32.totalorder 0, %v574
        %v576 = vsel %vm575, 0, %v574
        %v577 = vsub.s32 32, %v576
        %v578 = vshll.u32 %v569, %v576
        %v579 = vshrl.u32 %v561, %v577
        %v580 = vor.u32 %v578, %v579
        %v581 = vsub.s32 4294967266, %v576
        %v582 = vadd.s32 %v581, 127
        %v583 = vshll.u32 %v582, 23
        %v584 = vor.u32 4788187, %v583
        %v585 = vand.u32 2147483647, %v584
        %v587 = vcvt.s32.f32 %v580
        %v588 = vmul.f32 %v587, %v585
        %v589 = vxor.u32 %v588, 2147483648
        %v590 = vsel %vm507, %v589, %v588
        %v591 = vsub.s32 4, %v567
        %v592 = vsel %vm507, %v591, %v567
        %v593 = vsel %vm506, %v328, %v590
        %v594 = vsel %vm506, 0, %v592
        %v595 = vcosq.f32.pop %v593
        %v596 = vsinq.f32.pop %v593
        %vm597 = vweird.f32 %v328
        %v598 = vadd.s32 %v594, 3
        %v599 = vand.u32 %v598, 3
        %vm600 = vcmp.lt.s32.totalorder %v599, 2
        %vm601 = vcmp.eq.s32.totalorder %v599, 0
        %v602 = vxor.u32 %v596, 2147483648
        %v603 = vsel %vm601, %v595, %v602
        %vm604 = vcmp.eq.s32.totalorder %v599, 2
        %v605 = vxor.u32 %v595, 2147483648
        %v606 = vsel %vm604, %v605, %v596
        %v607 = vsel %vm600, %v603, %v606
        %v608 = vsel %vm597, nan, %v607
        %v609 = vand.u32 2147483647, %v333
        %vm610 = vcmp.le.f32.partialorder %v609, 0.7853982
        %vm611 = vcmp.lt.s32.totalorder %v333, 0
        %v612 = vand.u32 %v333, 2139095040
        %v613 = vshrl.u32 %v612, 23
        %v614 = vsub.s32 %v613, 127
        %v615 = vand.u32 2147483647, %v333
        %v616 = vand.u32 %v615, 8388607
        %v617 = vor.u32 %v616, 8388608
        %v618 = vsub.s32 0, %v617
        %v619 = vadd.s32 %v614, 1
        %vm620 = vcmp.gt.s32.totalorder %v619, 0
        %v621 = vsel %vm620, %v619, 0
        %v622 = vshrl.u32 %v621, 5
        %v623 = vand.u32 %v621, 31
        %v624 = vsub.s32 32, %v623
        %v625 = vshrl.u32 683565275, %v624
        %v626 = vshll.u32 683565275, %v623
        %v627 = vshrl.u32 2475754826, %v624
        %v628 = vor.u32 %v626, %v627
        %v629 = vshll.u32 2475754826, %v623
        %v630 = vshrl.u32 2131351028, %v624
        %v631 = vor.u32 %v629, %v630
        %v632 = vshll.u32 2131351028, %v623
        %v633 = vshrl.u32 2102212464, %v624
        %v634 = vor.u32 %v632, %v633
        %v635 = vshll.u32 2102212464, %v623
        %v636 = vshrl.u32 920167782, %v624
        %v637 = vor.u32 %v635, %v636
        %v638 = vshll.u32 920167782, %v623
        %v639 = vshrl.u32 1326507024, %v624
        %v640 = vor.u32 %v638, %v639
        %vm641 = vcmp.lt.s32.totalorder %v622, 1
        %vm642 = vcmp.lt.s32.totalorder %v622, 2
        %vm643 = vcmp.lt.s32.totalorder %v622, 3
        %vm644 = vcmp.lt.s32.totalorder %v622, 4
        %v645 = vsel %vm641, %v625, %v628
        %v646 = vsel %vm644, %v634, 2102212464
        %v647 = vsel %vm643, %v631, %v646
        %v648 = vsel %vm642, %v645, %v647
        %v649 = vsel %vm641, %v628, %v631
        %v650 = vsel %vm644, %v637, 920167782
        %v651 = vsel %vm643, %v634, %v650
        %v652 = vsel %vm642, %v649, %v651
        %v653 = vsel %vm641, %v631, %v634
        %v654 = vsel %vm644, %v640, 1326507024
        %v655 = vsel %vm643, %v637, %v654
        %v656 = vsel %vm642, %v653, %v655
        %v657 = vshll.u32 %v617, 8
        %v658 = vmul.u32.u64.compose %v657, %v656
        %v659 = vextract.low.u32 %v658
        %v660 = vextract.high.u32 %v658
        %v661 = vmul.u32.u64.compose %v657, %v652
        %v662 = vextract.low.u32 %v661
        %v663 = vextract.high.u32 %v661
        %v664 = vmul.u32 %v657, %v648
        %v665 = vadd.s32 %v660, %v662
        %vm666 = vc.u32 %v660, %v662
        %v667 = vadd.s32 %v663, 1
        %v668 = vsel %vm666, %v667, %v663
        %v669 = vadd.s32 %v664, %v668
        %v670 = vadd.s32 %v669, 536870912
        %v671 = vshrl.u32 %v670, 30
        %v672 = vshll.u32 %v671, 30
        %v673 = vsub.s32 %v669, %v672
        %vm674 = vcmp.lt.s32.totalorder %v673, 0
        %v675 = vsub.s32 0, %v673
        %v676 = vsel %vm674, %v675, %v673
        %v677 = vclz %v676
        %v678 = vsub.s32 %v677, 2
        %vm679 = vcmp.gt.s32.totalorder 0, %v678
        %v680 = vsel %vm679, 0, %v678
        %v681 = vsub.s32 32, %v680
        %v682 = vshll.u32 %v673, %v680
        %v683 = vshrl.u32 %v665, %v681
        %v684 = vor.u32 %v682, %v683
        %v685 = vsub.s32 4294967266, %v680
        %v686 = vadd.s32 %v685, 127
        %v687 = vshll.u32 %v686, 23
        %v688 = vor.u32 4788187, %v687
        %v689 = vand.u32 2147483647, %v688
        %v691 = vcvt.s32.f32 %v684
        %v692 = vmul.f32 %v691, %v689
        %v693 = vxor.u32 %v692, 2147483648
        %v694 = vsel %vm611, %v693, %v692
        %v695 = vsub.s32 4, %v671
        %v696 = vsel %vm611, %v695, %v671
        %v697 = vsel %vm610, %v333, %v694
        %v698 = vsel %vm610, 0, %v696
        %v699 = vcosq.f32.pop %v697
        %v700 = vsinq.f32.pop %v697
        %vm701 = vweird.f32 %v333
        %v702 = vadd.s32 %v698, 3
        %v703 = vand.u32 %v702, 3
        %vm704 = vcmp.lt.s32.totalorder %v703, 2
        %vm705 = vcmp.eq.s32.totalorder %v703, 0
        %v706 = vxor.u32 %v700, 2147483648
        %v707 = vsel %vm705, %v699, %v706
        %vm708 = vcmp.eq.s32.totalorder %v703, 2
        %v709 = vxor.u32 %v699, 2147483648
        %v710 = vsel %vm708, %v709, %v700
        %v711 = vsel %vm704, %v707, %v710
        %v712 = vsel %vm701, nan, %v711
        %v713 = vand.u32 2147483647, %v338
        %vm714 = vcmp.le.f32.partialorder %v713, 0.7853982
        %vm715 = vcmp.lt.s32.totalorder %v338, 0
        %v716 = vand.u32 %v338, 2139095040
        %v717 = vshrl.u32 %v716, 23
        %v718 = vsub.s32 %v717, 127
        %v719 = vand.u32 2147483647, %v338
        %v720 = vand.u32 %v719, 8388607
        %v721 = vor.u32 %v720, 8388608
        %v722 = vsub.s32 0, %v721
        %v723 = vadd.s32 %v718, 1
        %vm724 = vcmp.gt.s32.totalorder %v723, 0
        %v725 = vsel %vm724, %v723, 0
        %v726 = vshrl.u32 %v725, 5
        %v727 = vand.u32 %v725, 31
        %v728 = vsub.s32 32, %v727
        %v729 = vshrl.u32 683565275, %v728
        %v730 = vshll.u32 683565275, %v727
        %v731 = vshrl.u32 2475754826, %v728
        %v732 = vor.u32 %v730, %v731
        %v733 = vshll.u32 2475754826, %v727
        %v734 = vshrl.u32 2131351028, %v728
        %v735 = vor.u32 %v733, %v734
        %v736 = vshll.u32 2131351028, %v727
        %v737 = vshrl.u32 2102212464, %v728
        %v738 = vor.u32 %v736, %v737
        %v739 = vshll.u32 2102212464, %v727
        %v740 = vshrl.u32 920167782, %v728
        %v741 = vor.u32 %v739, %v740
        %v742 = vshll.u32 920167782, %v727
        %v743 = vshrl.u32 1326507024, %v728
        %v744 = vor.u32 %v742, %v743
        %vm745 = vcmp.lt.s32.totalorder %v726, 1
        %vm746 = vcmp.lt.s32.totalorder %v726, 2
        %vm747 = vcmp.lt.s32.totalorder %v726, 3
        %vm748 = vcmp.lt.s32.totalorder %v726, 4
        %v749 = vsel %vm745, %v729, %v732
        %v750 = vsel %vm748, %v738, 2102212464
        %v751 = vsel %vm747, %v735, %v750
        %v752 = vsel %vm746, %v749, %v751
        %v753 = vsel %vm745, %v732, %v735
        %v754 = vsel %vm748, %v741, 920167782
        %v755 = vsel %vm747, %v738, %v754
        %v756 = vsel %vm746, %v753, %v755
        %v757 = vsel %vm745, %v735, %v738
        %v758 = vsel %vm748, %v744, 1326507024
        %v759 = vsel %vm747, %v741, %v758
        %v760 = vsel %vm746, %v757, %v759
        %v761 = vshll.u32 %v721, 8
        %v762 = vmul.u32.u64.compose %v761, %v760
        %v763 = vextract.low.u32 %v762
        %v764 = vextract.high.u32 %v762
        %v765 = vmul.u32.u64.compose %v761, %v756
        %v766 = vextract.low.u32 %v765
        %v767 = vextract.high.u32 %v765
        %v768 = vmul.u32 %v761, %v752
        %v769 = vadd.s32 %v764, %v766
        %vm770 = vc.u32 %v764, %v766
        %v771 = vadd.s32 %v767, 1
        %v772 = vsel %vm770, %v771, %v767
        %v773 = vadd.s32 %v768, %v772
        %v774 = vadd.s32 %v773, 536870912
        %v775 = vshrl.u32 %v774, 30
        %v776 = vshll.u32 %v775, 30
        %v777 = vsub.s32 %v773, %v776
        %vm778 = vcmp.lt.s32.totalorder %v777, 0
        %v779 = vsub.s32 0, %v777
        %v780 = vsel %vm778, %v779, %v777
        %v781 = vclz %v780
        %v782 = vsub.s32 %v781, 2
        %vm783 = vcmp.gt.s32.totalorder 0, %v782
        %v784 = vsel %vm783, 0, %v782
        %v785 = vsub.s32 32, %v784
        %v786 = vshll.u32 %v777, %v784
        %v787 = vshrl.u32 %v769, %v785
        %v788 = vor.u32 %v786, %v787
        %v789 = vsub.s32 4294967266, %v784
        %v790 = vadd.s32 %v789, 127
        %v791 = vshll.u32 %v790, 23
        %v792 = vor.u32 4788187, %v791
        %v793 = vand.u32 2147483647, %v792
        %v795 = vcvt.s32.f32 %v788
        %v796 = vmul.f32 %v795, %v793
        %v797 = vxor.u32 %v796, 2147483648
        %v798 = vsel %vm715, %v797, %v796
        %v799 = vsub.s32 4, %v775
        %v800 = vsel %vm715, %v799, %v775
        %v801 = vsel %vm714, %v338, %v798
        %v802 = vsel %vm714, 0, %v800
        %v803 = vcosq.f32.pop %v801
        %v804 = vsinq.f32.pop %v801
        %vm805 = vweird.f32 %v338
        %v806 = vadd.s32 %v802, 3
        %v807 = vand.u32 %v806, 3
        %vm808 = vcmp.lt.s32.totalorder %v807, 2
        %vm809 = vcmp.eq.s32.totalorder %v807, 0
        %v810 = vxor.u32 %v804, 2147483648
        %v811 = vsel %vm809, %v803, %v810
        %vm812 = vcmp.eq.s32.totalorder %v807, 2
        %v813 = vxor.u32 %v803, 2147483648
        %v814 = vsel %vm812, %v813, %v804
        %v815 = vsel %vm808, %v811, %v814
        %v816 = vsel %vm805, nan, %v815
        %v817 = vand.u32 2147483647, %v343
        %vm818 = vcmp.le.f32.partialorder %v817, 0.7853982
        %vm819 = vcmp.lt.s32.totalorder %v343, 0
        %v820 = vand.u32 %v343, 2139095040
        %v821 = vshrl.u32 %v820, 23
        %v822 = vsub.s32 %v821, 127
        %v823 = vand.u32 2147483647, %v343
        %v824 = vand.u32 %v823, 8388607
        %v825 = vor.u32 %v824, 8388608
        %v826 = vsub.s32 0, %v825
        %v827 = vadd.s32 %v822, 1
        %vm828 = vcmp.gt.s32.totalorder %v827, 0
        %v829 = vsel %vm828, %v827, 0
        %v830 = vshrl.u32 %v829, 5
        %v831 = vand.u32 %v829, 31
        %v832 = vsub.s32 32, %v831
        %v833 = vshrl.u32 683565275, %v832
        %v834 = vshll.u32 683565275, %v831
        %v835 = vshrl.u32 2475754826, %v832
        %v836 = vor.u32 %v834, %v835
        %v837 = vshll.u32 2475754826, %v831
        %v838 = vshrl.u32 2131351028, %v832
        %v839 = vor.u32 %v837, %v838
        %v840 = vshll.u32 2131351028, %v831
        %v841 = vshrl.u32 2102212464, %v832
        %v842 = vor.u32 %v840, %v841
        %v843 = vshll.u32 2102212464, %v831
        %v844 = vshrl.u32 920167782, %v832
        %v845 = vor.u32 %v843, %v844
        %v846 = vshll.u32 920167782, %v831
        %v847 = vshrl.u32 1326507024, %v832
        %v848 = vor.u32 %v846, %v847
        %vm849 = vcmp.lt.s32.totalorder %v830, 1
        %vm850 = vcmp.lt.s32.totalorder %v830, 2
        %vm851 = vcmp.lt.s32.totalorder %v830, 3
        %vm852 = vcmp.lt.s32.totalorder %v830, 4
        %v853 = vsel %vm849, %v833, %v836
        %v854 = vsel %vm852, %v842, 2102212464
        %v855 = vsel %vm851, %v839, %v854
        %v856 = vsel %vm850, %v853, %v855
        %v857 = vsel %vm849, %v836, %v839
        %v858 = vsel %vm852, %v845, 920167782
        %v859 = vsel %vm851, %v842, %v858
        %v860 = vsel %vm850, %v857, %v859
        %v861 = vsel %vm849, %v839, %v842
        %v862 = vsel %vm852, %v848, 1326507024
        %v863 = vsel %vm851, %v845, %v862
        %v864 = vsel %vm850, %v861, %v863
        %v865 = vshll.u32 %v825, 8
        %v866 = vmul.u32.u64.compose %v865, %v864
        %v867 = vextract.low.u32 %v866
        %v868 = vextract.high.u32 %v866
        %v869 = vmul.u32.u64.compose %v865, %v860
        %v870 = vextract.low.u32 %v869
        %v871 = vextract.high.u32 %v869
        %v872 = vmul.u32 %v865, %v856
        %v873 = vadd.s32 %v868, %v870
        %vm874 = vc.u32 %v868, %v870
        %v875 = vadd.s32 %v871, 1
        %v876 = vsel %vm874, %v875, %v871
        %v877 = vadd.s32 %v872, %v876
        %v878 = vadd.s32 %v877, 536870912
        %v879 = vshrl.u32 %v878, 30
        %v880 = vshll.u32 %v879, 30
        %v881 = vsub.s32 %v877, %v880
        %vm882 = vcmp.lt.s32.totalorder %v881, 0
        %v883 = vsub.s32 0, %v881
        %v884 = vsel %vm882, %v883, %v881
        %v885 = vclz %v884
        %v886 = vsub.s32 %v885, 2
        %vm887 = vcmp.gt.s32.totalorder 0, %v886
        %v888 = vsel %vm887, 0, %v886
        %v889 = vsub.s32 32, %v888
        %v890 = vshll.u32 %v881, %v888
        %v891 = vshrl.u32 %v873, %v889
        %v892 = vor.u32 %v890, %v891
        %v893 = vsub.s32 4294967266, %v888
        %v894 = vadd.s32 %v893, 127
        %v895 = vshll.u32 %v894, 23
        %v896 = vor.u32 4788187, %v895
        %v897 = vand.u32 2147483647, %v896
        %v899 = vcvt.s32.f32 %v892
        %v900 = vmul.f32 %v899, %v897
        %v901 = vxor.u32 %v900, 2147483648
        %v902 = vsel %vm819, %v901, %v900
        %v903 = vsub.s32 4, %v879
        %v904 = vsel %vm819, %v903, %v879
        %v905 = vsel %vm818, %v343, %v902
        %v906 = vsel %vm818, 0, %v904
        %v907 = vcosq.f32.pop %v905
        %v908 = vsinq.f32.pop %v905
        %vm909 = vweird.f32 %v343
        %v910 = vadd.s32 %v906, 3
        %v911 = vand.u32 %v910, 3
        %vm912 = vcmp.lt.s32.totalorder %v911, 2
        %vm913 = vcmp.eq.s32.totalorder %v911, 0
        %v914 = vxor.u32 %v908, 2147483648
        %v915 = vsel %vm913, %v907, %v914
        %vm916 = vcmp.eq.s32.totalorder %v911, 2
        %v917 = vxor.u32 %v907, 2147483648
        %v918 = vsel %vm916, %v917, %v908
        %v919 = vsel %vm912, %v915, %v918
        %v920 = vsel %vm909, nan, %v919
        %v921 = vand.u32 2147483647, %v348
        %vm922 = vcmp.le.f32.partialorder %v921, 0.7853982
        %vm923 = vcmp.lt.s32.totalorder %v348, 0
        %v924 = vand.u32 %v348, 2139095040
        %v925 = vshrl.u32 %v924, 23
        %v926 = vsub.s32 %v925, 127
        %v927 = vand.u32 2147483647, %v348
        %v928 = vand.u32 %v927, 8388607
        %v929 = vor.u32 %v928, 8388608
        %v930 = vsub.s32 0, %v929
        %v931 = vadd.s32 %v926, 1
        %vm932 = vcmp.gt.s32.totalorder %v931, 0
        %v933 = vsel %vm932, %v931, 0
        %v934 = vshrl.u32 %v933, 5
        %v935 = vand.u32 %v933, 31
        %v936 = vsub.s32 32, %v935
        %v937 = vshrl.u32 683565275, %v936
        %v938 = vshll.u32 683565275, %v935
        %v939 = vshrl.u32 2475754826, %v936
        %v940 = vor.u32 %v938, %v939
        %v941 = vshll.u32 2475754826, %v935
        %v942 = vshrl.u32 2131351028, %v936
        %v943 = vor.u32 %v941, %v942
        %v944 = vshll.u32 2131351028, %v935
        %v945 = vshrl.u32 2102212464, %v936
        %v946 = vor.u32 %v944, %v945
        %v947 = vshll.u32 2102212464, %v935
        %v948 = vshrl.u32 920167782, %v936
        %v949 = vor.u32 %v947, %v948
        %v950 = vshll.u32 920167782, %v935
        %v951 = vshrl.u32 1326507024, %v936
        %v952 = vor.u32 %v950, %v951
        %vm953 = vcmp.lt.s32.totalorder %v934, 1
        %vm954 = vcmp.lt.s32.totalorder %v934, 2
        %vm955 = vcmp.lt.s32.totalorder %v934, 3
        %vm956 = vcmp.lt.s32.totalorder %v934, 4
        %v957 = vsel %vm953, %v937, %v940
        %v958 = vsel %vm956, %v946, 2102212464
        %v959 = vsel %vm955, %v943, %v958
        %v960 = vsel %vm954, %v957, %v959
        %v961 = vsel %vm953, %v940, %v943
        %v962 = vsel %vm956, %v949, 920167782
        %v963 = vsel %vm955, %v946, %v962
        %v964 = vsel %vm954, %v961, %v963
        %v965 = vsel %vm953, %v943, %v946
        %v966 = vsel %vm956, %v952, 1326507024
        %v967 = vsel %vm955, %v949, %v966
        %v968 = vsel %vm954, %v965, %v967
        %v969 = vshll.u32 %v929, 8
        %v970 = vmul.u32.u64.compose %v969, %v968
        %v971 = vextract.low.u32 %v970
        %v972 = vextract.high.u32 %v970
        %v973 = vmul.u32.u64.compose %v969, %v964
        %v974 = vextract.low.u32 %v973
        %v975 = vextract.high.u32 %v973
        %v976 = vmul.u32 %v969, %v960
        %v977 = vadd.s32 %v972, %v974
        %vm978 = vc.u32 %v972, %v974
        %v979 = vadd.s32 %v975, 1
        %v980 = vsel %vm978, %v979, %v975
        %v981 = vadd.s32 %v976, %v980
        %v982 = vadd.s32 %v981, 536870912
        %v983 = vshrl.u32 %v982, 30
        %v984 = vshll.u32 %v983, 30
        %v985 = vsub.s32 %v981, %v984
        %vm986 = vcmp.lt.s32.totalorder %v985, 0
        %v987 = vsub.s32 0, %v985
        %v988 = vsel %vm986, %v987, %v985
        %v989 = vclz %v988
        %v990 = vsub.s32 %v989, 2
        %vm991 = vcmp.gt.s32.totalorder 0, %v990
        %v992 = vsel %vm991, 0, %v990
        %v993 = vsub.s32 32, %v992
        %v994 = vshll.u32 %v985, %v992
        %v995 = vshrl.u32 %v977, %v993
        %v996 = vor.u32 %v994, %v995
        %v997 = vsub.s32 4294967266, %v992
        %v998 = vadd.s32 %v997, 127
        %v999 = vshll.u32 %v998, 23
        %v1000 = vor.u32 4788187, %v999
        %v1001 = vand.u32 2147483647, %v1000
        %v1003 = vcvt.s32.f32 %v996
        %v1004 = vmul.f32 %v1003, %v1001
        %v1005 = vxor.u32 %v1004, 2147483648
        %v1006 = vsel %vm923, %v1005, %v1004
        %v1007 = vsub.s32 4, %v983
        %v1008 = vsel %vm923, %v1007, %v983
        %v1009 = vsel %vm922, %v348, %v1006
        %v1010 = vsel %vm922, 0, %v1008
        %v1011 = vcosq.f32.pop %v1009
        %v1012 = vsinq.f32.pop %v1009
        %vm1013 = vweird.f32 %v348
        %v1014 = vadd.s32 %v1010, 3
        %v1015 = vand.u32 %v1014, 3
        %vm1016 = vcmp.lt.s32.totalorder %v1015, 2
        %vm1017 = vcmp.eq.s32.totalorder %v1015, 0
        %v1018 = vxor.u32 %v1012, 2147483648
        %v1019 = vsel %vm1017, %v1011, %v1018
        %vm1020 = vcmp.eq.s32.totalorder %v1015, 2
        %v1021 = vxor.u32 %v1011, 2147483648
        %v1022 = vsel %vm1020, %v1021, %v1012
        %v1023 = vsel %vm1016, %v1019, %v1022
        %v1024 = vsel %vm1013, nan, %v1023
        %v1025 = vand.u32 2147483647, %v353
        %vm1026 = vcmp.le.f32.partialorder %v1025, 0.7853982
        %vm1027 = vcmp.lt.s32.totalorder %v353, 0
        %v1028 = vand.u32 %v353, 2139095040
        %v1029 = vshrl.u32 %v1028, 23
        %v1030 = vsub.s32 %v1029, 127
        %v1031 = vand.u32 2147483647, %v353
        %v1032 = vand.u32 %v1031, 8388607
        %v1033 = vor.u32 %v1032, 8388608
        %v1034 = vsub.s32 0, %v1033
        %v1035 = vadd.s32 %v1030, 1
        %vm1036 = vcmp.gt.s32.totalorder %v1035, 0
        %v1037 = vsel %vm1036, %v1035, 0
        %v1038 = vshrl.u32 %v1037, 5
        %v1039 = vand.u32 %v1037, 31
        %v1040 = vsub.s32 32, %v1039
        %v1041 = vshrl.u32 683565275, %v1040
        %v1042 = vshll.u32 683565275, %v1039
        %v1043 = vshrl.u32 2475754826, %v1040
        %v1044 = vor.u32 %v1042, %v1043
        %v1045 = vshll.u32 2475754826, %v1039
        %v1046 = vshrl.u32 2131351028, %v1040
        %v1047 = vor.u32 %v1045, %v1046
        %v1048 = vshll.u32 2131351028, %v1039
        %v1049 = vshrl.u32 2102212464, %v1040
        %v1050 = vor.u32 %v1048, %v1049
        %v1051 = vshll.u32 2102212464, %v1039
        %v1052 = vshrl.u32 920167782, %v1040
        %v1053 = vor.u32 %v1051, %v1052
        %v1054 = vshll.u32 920167782, %v1039
        %v1055 = vshrl.u32 1326507024, %v1040
        %v1056 = vor.u32 %v1054, %v1055
        %vm1057 = vcmp.lt.s32.totalorder %v1038, 1
        %vm1058 = vcmp.lt.s32.totalorder %v1038, 2
        %vm1059 = vcmp.lt.s32.totalorder %v1038, 3
        %vm1060 = vcmp.lt.s32.totalorder %v1038, 4
        %v1061 = vsel %vm1057, %v1041, %v1044
        %v1062 = vsel %vm1060, %v1050, 2102212464
        %v1063 = vsel %vm1059, %v1047, %v1062
        %v1064 = vsel %vm1058, %v1061, %v1063
        %v1065 = vsel %vm1057, %v1044, %v1047
        %v1066 = vsel %vm1060, %v1053, 920167782
        %v1067 = vsel %vm1059, %v1050, %v1066
        %v1068 = vsel %vm1058, %v1065, %v1067
        %v1069 = vsel %vm1057, %v1047, %v1050
        %v1070 = vsel %vm1060, %v1056, 1326507024
        %v1071 = vsel %vm1059, %v1053, %v1070
        %v1072 = vsel %vm1058, %v1069, %v1071
        %v1073 = vshll.u32 %v1033, 8
        %v1074 = vmul.u32.u64.compose %v1073, %v1072
        %v1075 = vextract.low.u32 %v1074
        %v1076 = vextract.high.u32 %v1074
        %v1077 = vmul.u32.u64.compose %v1073, %v1068
        %v1078 = vextract.low.u32 %v1077
        %v1079 = vextract.high.u32 %v1077
        %v1080 = vmul.u32 %v1073, %v1064
        %v1081 = vadd.s32 %v1076, %v1078
        %vm1082 = vc.u32 %v1076, %v1078
        %v1083 = vadd.s32 %v1079, 1
        %v1084 = vsel %vm1082, %v1083, %v1079
        %v1085 = vadd.s32 %v1080, %v1084
        %v1086 = vadd.s32 %v1085, 536870912
        %v1087 = vshrl.u32 %v1086, 30
        %v1088 = vshll.u32 %v1087, 30
        %v1089 = vsub.s32 %v1085, %v1088
        %vm1090 = vcmp.lt.s32.totalorder %v1089, 0
        %v1091 = vsub.s32 0, %v1089
        %v1092 = vsel %vm1090, %v1091, %v1089
        %v1093 = vclz %v1092
        %v1094 = vsub.s32 %v1093, 2
        %vm1095 = vcmp.gt.s32.totalorder 0, %v1094
        %v1096 = vsel %vm1095, 0, %v1094
        %v1097 = vsub.s32 32, %v1096
        %v1098 = vshll.u32 %v1089, %v1096
        %v1099 = vshrl.u32 %v1081, %v1097
        %v1100 = vor.u32 %v1098, %v1099
        %v1101 = vsub.s32 4294967266, %v1096
        %v1102 = vadd.s32 %v1101, 127
        %v1103 = vshll.u32 %v1102, 23
        %v1104 = vor.u32 4788187, %v1103
        %v1105 = vand.u32 2147483647, %v1104
        %v1107 = vcvt.s32.f32 %v1100
        %v1108 = vmul.f32 %v1107, %v1105
        %v1109 = vxor.u32 %v1108, 2147483648
        %v1110 = vsel %vm1027, %v1109, %v1108
        %v1111 = vsub.s32 4, %v1087
        %v1112 = vsel %vm1027, %v1111, %v1087
        %v1113 = vsel %vm1026, %v353, %v1110
        %v1114 = vsel %vm1026, 0, %v1112
        %v1115 = vcosq.f32.pop %v1113
        %v1116 = vsinq.f32.pop %v1113
        %vm1117 = vweird.f32 %v353
        %v1118 = vadd.s32 %v1114, 3
        %v1119 = vand.u32 %v1118, 3
        %vm1120 = vcmp.lt.s32.totalorder %v1119, 2
        %vm1121 = vcmp.eq.s32.totalorder %v1119, 0
        %v1122 = vxor.u32 %v1116, 2147483648
        %v1123 = vsel %vm1121, %v1115, %v1122
        %vm1124 = vcmp.eq.s32.totalorder %v1119, 2
        %v1125 = vxor.u32 %v1115, 2147483648
        %v1126 = vsel %vm1124, %v1125, %v1116
        %v1127 = vsel %vm1120, %v1123, %v1126
        %v1128 = vsel %vm1117, nan, %v1127
        %v1129 = vand.u32 2147483647, %v358
        %vm1130 = vcmp.le.f32.partialorder %v1129, 0.7853982
        %vm1131 = vcmp.lt.s32.totalorder %v358, 0
        %v1132 = vand.u32 %v358, 2139095040
        %v1133 = vshrl.u32 %v1132, 23
        %v1134 = vsub.s32 %v1133, 127
        %v1135 = vand.u32 2147483647, %v358
        %v1136 = vand.u32 %v1135, 8388607
        %v1137 = vor.u32 %v1136, 8388608
        %v1138 = vsub.s32 0, %v1137
        %v1139 = vadd.s32 %v1134, 1
        %vm1140 = vcmp.gt.s32.totalorder %v1139, 0
        %v1141 = vsel %vm1140, %v1139, 0
        %v1142 = vshrl.u32 %v1141, 5
        %v1143 = vand.u32 %v1141, 31
        %v1144 = vsub.s32 32, %v1143
        %v1145 = vshrl.u32 683565275, %v1144
        %v1146 = vshll.u32 683565275, %v1143
        %v1147 = vshrl.u32 2475754826, %v1144
        %v1148 = vor.u32 %v1146, %v1147
        %v1149 = vshll.u32 2475754826, %v1143
        %v1150 = vshrl.u32 2131351028, %v1144
        %v1151 = vor.u32 %v1149, %v1150
        %v1152 = vshll.u32 2131351028, %v1143
        %v1153 = vshrl.u32 2102212464, %v1144
        %v1154 = vor.u32 %v1152, %v1153
        %v1155 = vshll.u32 2102212464, %v1143
        %v1156 = vshrl.u32 920167782, %v1144
        %v1157 = vor.u32 %v1155, %v1156
        %v1158 = vshll.u32 920167782, %v1143
        %v1159 = vshrl.u32 1326507024, %v1144
        %v1160 = vor.u32 %v1158, %v1159
        %vm1161 = vcmp.lt.s32.totalorder %v1142, 1
        %vm1162 = vcmp.lt.s32.totalorder %v1142, 2
        %vm1163 = vcmp.lt.s32.totalorder %v1142, 3
        %vm1164 = vcmp.lt.s32.totalorder %v1142, 4
        %v1165 = vsel %vm1161, %v1145, %v1148
        %v1166 = vsel %vm1164, %v1154, 2102212464
        %v1167 = vsel %vm1163, %v1151, %v1166
        %v1168 = vsel %vm1162, %v1165, %v1167
        %v1169 = vsel %vm1161, %v1148, %v1151
        %v1170 = vsel %vm1164, %v1157, 920167782
        %v1171 = vsel %vm1163, %v1154, %v1170
        %v1172 = vsel %vm1162, %v1169, %v1171
        %v1173 = vsel %vm1161, %v1151, %v1154
        %v1174 = vsel %vm1164, %v1160, 1326507024
        %v1175 = vsel %vm1163, %v1157, %v1174
        %v1176 = vsel %vm1162, %v1173, %v1175
        %v1177 = vshll.u32 %v1137, 8
        %v1178 = vmul.u32.u64.compose %v1177, %v1176
        %v1179 = vextract.low.u32 %v1178
        %v1180 = vextract.high.u32 %v1178
        %v1181 = vmul.u32.u64.compose %v1177, %v1172
        %v1182 = vextract.low.u32 %v1181
        %v1183 = vextract.high.u32 %v1181
        %v1184 = vmul.u32 %v1177, %v1168
        %v1185 = vadd.s32 %v1180, %v1182
        %vm1186 = vc.u32 %v1180, %v1182
        %v1187 = vadd.s32 %v1183, 1
        %v1188 = vsel %vm1186, %v1187, %v1183
        %v1189 = vadd.s32 %v1184, %v1188
        %v1190 = vadd.s32 %v1189, 536870912
        %v1191 = vshrl.u32 %v1190, 30
        %v1192 = vshll.u32 %v1191, 30
        %v1193 = vsub.s32 %v1189, %v1192
        %vm1194 = vcmp.lt.s32.totalorder %v1193, 0
        %v1195 = vsub.s32 0, %v1193
        %v1196 = vsel %vm1194, %v1195, %v1193
        %v1197 = vclz %v1196
        %v1198 = vsub.s32 %v1197, 2
        %vm1199 = vcmp.gt.s32.totalorder 0, %v1198
        %v1200 = vsel %vm1199, 0, %v1198
        %v1201 = vsub.s32 32, %v1200
        %v1202 = vshll.u32 %v1193, %v1200
        %v1203 = vshrl.u32 %v1185, %v1201
        %v1204 = vor.u32 %v1202, %v1203
        %v1205 = vsub.s32 4294967266, %v1200
        %v1206 = vadd.s32 %v1205, 127
        %v1207 = vshll.u32 %v1206, 23
        %v1208 = vor.u32 4788187, %v1207
        %v1209 = vand.u32 2147483647, %v1208
        %v1211 = vcvt.s32.f32 %v1204
        %v1212 = vmul.f32 %v1211, %v1209
        %v1213 = vxor.u32 %v1212, 2147483648
        %v1214 = vsel %vm1131, %v1213, %v1212
        %v1215 = vsub.s32 4, %v1191
        %v1216 = vsel %vm1131, %v1215, %v1191
        %v1217 = vsel %vm1130, %v358, %v1214
        %v1218 = vsel %vm1130, 0, %v1216
        %v1219 = vcosq.f32.pop %v1217
        %v1220 = vsinq.f32.pop %v1217
        %vm1221 = vweird.f32 %v358
        %v1222 = vadd.s32 %v1218, 3
        %v1223 = vand.u32 %v1222, 3
        %vm1224 = vcmp.lt.s32.totalorder %v1223, 2
        %vm1225 = vcmp.eq.s32.totalorder %v1223, 0
        %v1226 = vxor.u32 %v1220, 2147483648
        %v1227 = vsel %vm1225, %v1219, %v1226
        %vm1228 = vcmp.eq.s32.totalorder %v1223, 2
        %v1229 = vxor.u32 %v1219, 2147483648
        %v1230 = vsel %vm1228, %v1229, %v1220
        %v1231 = vsel %vm1224, %v1227, %v1230
        %v1232 = vsel %vm1221, nan, %v1231
        %v1233 = vand.u32 2147483647, %v363
        %vm1234 = vcmp.le.f32.partialorder %v1233, 0.7853982
        %vm1235 = vcmp.lt.s32.totalorder %v363, 0
        %v1236 = vand.u32 %v363, 2139095040
        %v1237 = vshrl.u32 %v1236, 23
        %v1238 = vsub.s32 %v1237, 127
        %v1239 = vand.u32 2147483647, %v363
        %v1240 = vand.u32 %v1239, 8388607
        %v1241 = vor.u32 %v1240, 8388608
        %v1242 = vsub.s32 0, %v1241
        %v1243 = vadd.s32 %v1238, 1
        %vm1244 = vcmp.gt.s32.totalorder %v1243, 0
        %v1245 = vsel %vm1244, %v1243, 0
        %v1246 = vshrl.u32 %v1245, 5
        %v1247 = vand.u32 %v1245, 31
        %v1248 = vsub.s32 32, %v1247
        %v1249 = vshrl.u32 683565275, %v1248
        %v1250 = vshll.u32 683565275, %v1247
        %v1251 = vshrl.u32 2475754826, %v1248
        %v1252 = vor.u32 %v1250, %v1251
        %v1253 = vshll.u32 2475754826, %v1247
        %v1254 = vshrl.u32 2131351028, %v1248
        %v1255 = vor.u32 %v1253, %v1254
        %v1256 = vshll.u32 2131351028, %v1247
        %v1257 = vshrl.u32 2102212464, %v1248
        %v1258 = vor.u32 %v1256, %v1257
        %v1259 = vshll.u32 2102212464, %v1247
        %v1260 = vshrl.u32 920167782, %v1248
        %v1261 = vor.u32 %v1259, %v1260
        %v1262 = vshll.u32 920167782, %v1247
        %v1263 = vshrl.u32 1326507024, %v1248
        %v1264 = vor.u32 %v1262, %v1263
        %vm1265 = vcmp.lt.s32.totalorder %v1246, 1
        %vm1266 = vcmp.lt.s32.totalorder %v1246, 2
        %vm1267 = vcmp.lt.s32.totalorder %v1246, 3
        %vm1268 = vcmp.lt.s32.totalorder %v1246, 4
        %v1269 = vsel %vm1265, %v1249, %v1252
        %v1270 = vsel %vm1268, %v1258, 2102212464
        %v1271 = vsel %vm1267, %v1255, %v1270
        %v1272 = vsel %vm1266, %v1269, %v1271
        %v1273 = vsel %vm1265, %v1252, %v1255
        %v1274 = vsel %vm1268, %v1261, 920167782
        %v1275 = vsel %vm1267, %v1258, %v1274
        %v1276 = vsel %vm1266, %v1273, %v1275
        %v1277 = vsel %vm1265, %v1255, %v1258
        %v1278 = vsel %vm1268, %v1264, 1326507024
        %v1279 = vsel %vm1267, %v1261, %v1278
        %v1280 = vsel %vm1266, %v1277, %v1279
        %v1281 = vshll.u32 %v1241, 8
        %v1282 = vmul.u32.u64.compose %v1281, %v1280
        %v1283 = vextract.low.u32 %v1282
        %v1284 = vextract.high.u32 %v1282
        %v1285 = vmul.u32.u64.compose %v1281, %v1276
        %v1286 = vextract.low.u32 %v1285
        %v1287 = vextract.high.u32 %v1285
        %v1288 = vmul.u32 %v1281, %v1272
        %v1289 = vadd.s32 %v1284, %v1286
        %vm1290 = vc.u32 %v1284, %v1286
        %v1291 = vadd.s32 %v1287, 1
        %v1292 = vsel %vm1290, %v1291, %v1287
        %v1293 = vadd.s32 %v1288, %v1292
        %v1294 = vadd.s32 %v1293, 536870912
        %v1295 = vshrl.u32 %v1294, 30
        %v1296 = vshll.u32 %v1295, 30
        %v1297 = vsub.s32 %v1293, %v1296
        %vm1298 = vcmp.lt.s32.totalorder %v1297, 0
        %v1299 = vsub.s32 0, %v1297
        %v1300 = vsel %vm1298, %v1299, %v1297
        %v1301 = vclz %v1300
        %v1302 = vsub.s32 %v1301, 2
        %vm1303 = vcmp.gt.s32.totalorder 0, %v1302
        %v1304 = vsel %vm1303, 0, %v1302
        %v1305 = vsub.s32 32, %v1304
        %v1306 = vshll.u32 %v1297, %v1304
        %v1307 = vshrl.u32 %v1289, %v1305
        %v1308 = vor.u32 %v1306, %v1307
        %v1309 = vsub.s32 4294967266, %v1304
        %v1310 = vadd.s32 %v1309, 127
        %v1311 = vshll.u32 %v1310, 23
        %v1312 = vor.u32 4788187, %v1311
        %v1313 = vand.u32 2147483647, %v1312
        %v1315 = vcvt.s32.f32 %v1308
        %v1316 = vmul.f32 %v1315, %v1313
        %v1317 = vxor.u32 %v1316, 2147483648
        %v1318 = vsel %vm1235, %v1317, %v1316
        %v1319 = vsub.s32 4, %v1295
        %v1320 = vsel %vm1235, %v1319, %v1295
        %v1321 = vsel %vm1234, %v363, %v1318
        %v1322 = vsel %vm1234, 0, %v1320
        %v1323 = vcosq.f32.pop %v1321
        %v1324 = vsinq.f32.pop %v1321
        %vm1325 = vweird.f32 %v363
        %v1326 = vadd.s32 %v1322, 3
        %v1327 = vand.u32 %v1326, 3
        %vm1328 = vcmp.lt.s32.totalorder %v1327, 2
        %vm1329 = vcmp.eq.s32.totalorder %v1327, 0
        %v1330 = vxor.u32 %v1324, 2147483648
        %v1331 = vsel %vm1329, %v1323, %v1330
        %vm1332 = vcmp.eq.s32.totalorder %v1327, 2
        %v1333 = vxor.u32 %v1323, 2147483648
        %v1334 = vsel %vm1332, %v1333, %v1324
        %v1335 = vsel %vm1328, %v1331, %v1334
        %v1336 = vsel %vm1325, nan, %v1335
        %v1337 = vand.u32 2147483647, %v368
        %vm1338 = vcmp.le.f32.partialorder %v1337, 0.7853982
        %vm1339 = vcmp.lt.s32.totalorder %v368, 0
        %v1340 = vand.u32 %v368, 2139095040
        %v1341 = vshrl.u32 %v1340, 23
        %v1342 = vsub.s32 %v1341, 127
        %v1343 = vand.u32 2147483647, %v368
        %v1344 = vand.u32 %v1343, 8388607
        %v1345 = vor.u32 %v1344, 8388608
        %v1346 = vsub.s32 0, %v1345
        %v1347 = vadd.s32 %v1342, 1
        %vm1348 = vcmp.gt.s32.totalorder %v1347, 0
        %v1349 = vsel %vm1348, %v1347, 0
        %v1350 = vshrl.u32 %v1349, 5
        %v1351 = vand.u32 %v1349, 31
        %v1352 = vsub.s32 32, %v1351
        %v1353 = vshrl.u32 683565275, %v1352
        %v1354 = vshll.u32 683565275, %v1351
        %v1355 = vshrl.u32 2475754826, %v1352
        %v1356 = vor.u32 %v1354, %v1355
        %v1357 = vshll.u32 2475754826, %v1351
        %v1358 = vshrl.u32 2131351028, %v1352
        %v1359 = vor.u32 %v1357, %v1358
        %v1360 = vshll.u32 2131351028, %v1351
        %v1361 = vshrl.u32 2102212464, %v1352
        %v1362 = vor.u32 %v1360, %v1361
        %v1363 = vshll.u32 2102212464, %v1351
        %v1364 = vshrl.u32 920167782, %v1352
        %v1365 = vor.u32 %v1363, %v1364
        %v1366 = vshll.u32 920167782, %v1351
        %v1367 = vshrl.u32 1326507024, %v1352
        %v1368 = vor.u32 %v1366, %v1367
        %vm1369 = vcmp.lt.s32.totalorder %v1350, 1
        %vm1370 = vcmp.lt.s32.totalorder %v1350, 2
        %vm1371 = vcmp.lt.s32.totalorder %v1350, 3
        %vm1372 = vcmp.lt.s32.totalorder %v1350, 4
        %v1373 = vsel %vm1369, %v1353, %v1356
        %v1374 = vsel %vm1372, %v1362, 2102212464
        %v1375 = vsel %vm1371, %v1359, %v1374
        %v1376 = vsel %vm1370, %v1373, %v1375
        %v1377 = vsel %vm1369, %v1356, %v1359
        %v1378 = vsel %vm1372, %v1365, 920167782
        %v1379 = vsel %vm1371, %v1362, %v1378
        %v1380 = vsel %vm1370, %v1377, %v1379
        %v1381 = vsel %vm1369, %v1359, %v1362
        %v1382 = vsel %vm1372, %v1368, 1326507024
        %v1383 = vsel %vm1371, %v1365, %v1382
        %v1384 = vsel %vm1370, %v1381, %v1383
        %v1385 = vshll.u32 %v1345, 8
        %v1386 = vmul.u32.u64.compose %v1385, %v1384
        %v1387 = vextract.low.u32 %v1386
        %v1388 = vextract.high.u32 %v1386
        %v1389 = vmul.u32.u64.compose %v1385, %v1380
        %v1390 = vextract.low.u32 %v1389
        %v1391 = vextract.high.u32 %v1389
        %v1392 = vmul.u32 %v1385, %v1376
        %v1393 = vadd.s32 %v1388, %v1390
        %vm1394 = vc.u32 %v1388, %v1390
        %v1395 = vadd.s32 %v1391, 1
        %v1396 = vsel %vm1394, %v1395, %v1391
        %v1397 = vadd.s32 %v1392, %v1396
        %v1398 = vadd.s32 %v1397, 536870912
        %v1399 = vshrl.u32 %v1398, 30
        %v1400 = vshll.u32 %v1399, 30
        %v1401 = vsub.s32 %v1397, %v1400
        %vm1402 = vcmp.lt.s32.totalorder %v1401, 0
        %v1403 = vsub.s32 0, %v1401
        %v1404 = vsel %vm1402, %v1403, %v1401
        %v1405 = vclz %v1404
        %v1406 = vsub.s32 %v1405, 2
        %vm1407 = vcmp.gt.s32.totalorder 0, %v1406
        %v1408 = vsel %vm1407, 0, %v1406
        %v1409 = vsub.s32 32, %v1408
        %v1410 = vshll.u32 %v1401, %v1408
        %v1411 = vshrl.u32 %v1393, %v1409
        %v1412 = vor.u32 %v1410, %v1411
        %v1413 = vsub.s32 4294967266, %v1408
        %v1414 = vadd.s32 %v1413, 127
        %v1415 = vshll.u32 %v1414, 23
        %v1416 = vor.u32 4788187, %v1415
        %v1417 = vand.u32 2147483647, %v1416
        %v1419 = vcvt.s32.f32 %v1412
        %v1420 = vmul.f32 %v1419, %v1417
        %v1421 = vxor.u32 %v1420, 2147483648
        %v1422 = vsel %vm1339, %v1421, %v1420
        %v1423 = vsub.s32 4, %v1399
        %v1424 = vsel %vm1339, %v1423, %v1399
        %v1425 = vsel %vm1338, %v368, %v1422
        %v1426 = vsel %vm1338, 0, %v1424
        %v1427 = vcosq.f32.pop %v1425
        %v1428 = vsinq.f32.pop %v1425
        %vm1429 = vweird.f32 %v368
        %v1430 = vadd.s32 %v1426, 3
        %v1431 = vand.u32 %v1430, 3
        %vm1432 = vcmp.lt.s32.totalorder %v1431, 2
        %vm1433 = vcmp.eq.s32.totalorder %v1431, 0
        %v1434 = vxor.u32 %v1428, 2147483648
        %v1435 = vsel %vm1433, %v1427, %v1434
        %vm1436 = vcmp.eq.s32.totalorder %v1431, 2
        %v1437 = vxor.u32 %v1427, 2147483648
        %v1438 = vsel %vm1436, %v1437, %v1428
        %v1439 = vsel %vm1432, %v1435, %v1438
        %v1440 = vsel %vm1429, nan, %v1439
        %v1441 = vand.u32 2147483647, %v373
        %vm1442 = vcmp.le.f32.partialorder %v1441, 0.7853982
        %vm1443 = vcmp.lt.s32.totalorder %v373, 0
        %v1444 = vand.u32 %v373, 2139095040
        %v1445 = vshrl.u32 %v1444, 23
        %v1446 = vsub.s32 %v1445, 127
        %v1447 = vand.u32 2147483647, %v373
        %v1448 = vand.u32 %v1447, 8388607
        %v1449 = vor.u32 %v1448, 8388608
        %v1450 = vsub.s32 0, %v1449
        %v1451 = vadd.s32 %v1446, 1
        %vm1452 = vcmp.gt.s32.totalorder %v1451, 0
        %v1453 = vsel %vm1452, %v1451, 0
        %v1454 = vshrl.u32 %v1453, 5
        %v1455 = vand.u32 %v1453, 31
        %v1456 = vsub.s32 32, %v1455
        %v1457 = vshrl.u32 683565275, %v1456
        %v1458 = vshll.u32 683565275, %v1455
        %v1459 = vshrl.u32 2475754826, %v1456
        %v1460 = vor.u32 %v1458, %v1459
        %v1461 = vshll.u32 2475754826, %v1455
        %v1462 = vshrl.u32 2131351028, %v1456
        %v1463 = vor.u32 %v1461, %v1462
        %v1464 = vshll.u32 2131351028, %v1455
        %v1465 = vshrl.u32 2102212464, %v1456
        %v1466 = vor.u32 %v1464, %v1465
        %v1467 = vshll.u32 2102212464, %v1455
        %v1468 = vshrl.u32 920167782, %v1456
        %v1469 = vor.u32 %v1467, %v1468
        %v1470 = vshll.u32 920167782, %v1455
        %v1471 = vshrl.u32 1326507024, %v1456
        %v1472 = vor.u32 %v1470, %v1471
        %vm1473 = vcmp.lt.s32.totalorder %v1454, 1
        %vm1474 = vcmp.lt.s32.totalorder %v1454, 2
        %vm1475 = vcmp.lt.s32.totalorder %v1454, 3
        %vm1476 = vcmp.lt.s32.totalorder %v1454, 4
        %v1477 = vsel %vm1473, %v1457, %v1460
        %v1478 = vsel %vm1476, %v1466, 2102212464
        %v1479 = vsel %vm1475, %v1463, %v1478
        %v1480 = vsel %vm1474, %v1477, %v1479
        %v1481 = vsel %vm1473, %v1460, %v1463
        %v1482 = vsel %vm1476, %v1469, 920167782
        %v1483 = vsel %vm1475, %v1466, %v1482
        %v1484 = vsel %vm1474, %v1481, %v1483
        %v1485 = vsel %vm1473, %v1463, %v1466
        %v1486 = vsel %vm1476, %v1472, 1326507024
        %v1487 = vsel %vm1475, %v1469, %v1486
        %v1488 = vsel %vm1474, %v1485, %v1487
        %v1489 = vshll.u32 %v1449, 8
        %v1490 = vmul.u32.u64.compose %v1489, %v1488
        %v1491 = vextract.low.u32 %v1490
        %v1492 = vextract.high.u32 %v1490
        %v1493 = vmul.u32.u64.compose %v1489, %v1484
        %v1494 = vextract.low.u32 %v1493
        %v1495 = vextract.high.u32 %v1493
        %v1496 = vmul.u32 %v1489, %v1480
        %v1497 = vadd.s32 %v1492, %v1494
        %vm1498 = vc.u32 %v1492, %v1494
        %v1499 = vadd.s32 %v1495, 1
        %v1500 = vsel %vm1498, %v1499, %v1495
        %v1501 = vadd.s32 %v1496, %v1500
        %v1502 = vadd.s32 %v1501, 536870912
        %v1503 = vshrl.u32 %v1502, 30
        %v1504 = vshll.u32 %v1503, 30
        %v1505 = vsub.s32 %v1501, %v1504
        %vm1506 = vcmp.lt.s32.totalorder %v1505, 0
        %v1507 = vsub.s32 0, %v1505
        %v1508 = vsel %vm1506, %v1507, %v1505
        %v1509 = vclz %v1508
        %v1510 = vsub.s32 %v1509, 2
        %vm1511 = vcmp.gt.s32.totalorder 0, %v1510
        %v1512 = vsel %vm1511, 0, %v1510
        %v1513 = vsub.s32 32, %v1512
        %v1514 = vshll.u32 %v1505, %v1512
        %v1515 = vshrl.u32 %v1497, %v1513
        %v1516 = vor.u32 %v1514, %v1515
        %v1517 = vsub.s32 4294967266, %v1512
        %v1518 = vadd.s32 %v1517, 127
        %v1519 = vshll.u32 %v1518, 23
        %v1520 = vor.u32 4788187, %v1519
        %v1521 = vand.u32 2147483647, %v1520
        %v1523 = vcvt.s32.f32 %v1516
        %v1524 = vmul.f32 %v1523, %v1521
        %v1525 = vxor.u32 %v1524, 2147483648
        %v1526 = vsel %vm1443, %v1525, %v1524
        %v1527 = vsub.s32 4, %v1503
        %v1528 = vsel %vm1443, %v1527, %v1503
        %v1529 = vsel %vm1442, %v373, %v1526
        %v1530 = vsel %vm1442, 0, %v1528
        %v1531 = vcosq.f32.pop %v1529
        %v1532 = vsinq.f32.pop %v1529
        %vm1533 = vweird.f32 %v373
        %v1534 = vadd.s32 %v1530, 3
        %v1535 = vand.u32 %v1534, 3
        %vm1536 = vcmp.lt.s32.totalorder %v1535, 2
        %vm1537 = vcmp.eq.s32.totalorder %v1535, 0
        %v1538 = vxor.u32 %v1532, 2147483648
        %v1539 = vsel %vm1537, %v1531, %v1538
        %vm1540 = vcmp.eq.s32.totalorder %v1535, 2
        %v1541 = vxor.u32 %v1531, 2147483648
        %v1542 = vsel %vm1540, %v1541, %v1532
        %v1543 = vsel %vm1536, %v1539, %v1542
        %v1544 = vsel %vm1533, nan, %v1543
        %v1545 = vand.u32 2147483647, %v378
        %vm1546 = vcmp.le.f32.partialorder %v1545, 0.7853982
        %vm1547 = vcmp.lt.s32.totalorder %v378, 0
        %v1548 = vand.u32 %v378, 2139095040
        %v1549 = vshrl.u32 %v1548, 23
        %v1550 = vsub.s32 %v1549, 127
        %v1551 = vand.u32 2147483647, %v378
        %v1552 = vand.u32 %v1551, 8388607
        %v1553 = vor.u32 %v1552, 8388608
        %v1554 = vsub.s32 0, %v1553
        %v1555 = vadd.s32 %v1550, 1
        %vm1556 = vcmp.gt.s32.totalorder %v1555, 0
        %v1557 = vsel %vm1556, %v1555, 0
        %v1558 = vshrl.u32 %v1557, 5
        %v1559 = vand.u32 %v1557, 31
        %v1560 = vsub.s32 32, %v1559
        %v1561 = vshrl.u32 683565275, %v1560
        %v1562 = vshll.u32 683565275, %v1559
        %v1563 = vshrl.u32 2475754826, %v1560
        %v1564 = vor.u32 %v1562, %v1563
        %v1565 = vshll.u32 2475754826, %v1559
        %v1566 = vshrl.u32 2131351028, %v1560
        %v1567 = vor.u32 %v1565, %v1566
        %v1568 = vshll.u32 2131351028, %v1559
        %v1569 = vshrl.u32 2102212464, %v1560
        %v1570 = vor.u32 %v1568, %v1569
        %v1571 = vshll.u32 2102212464, %v1559
        %v1572 = vshrl.u32 920167782, %v1560
        %v1573 = vor.u32 %v1571, %v1572
        %v1574 = vshll.u32 920167782, %v1559
        %v1575 = vshrl.u32 1326507024, %v1560
        %v1576 = vor.u32 %v1574, %v1575
        %vm1577 = vcmp.lt.s32.totalorder %v1558, 1
        %vm1578 = vcmp.lt.s32.totalorder %v1558, 2
        %vm1579 = vcmp.lt.s32.totalorder %v1558, 3
        %vm1580 = vcmp.lt.s32.totalorder %v1558, 4
        %v1581 = vsel %vm1577, %v1561, %v1564
        %v1582 = vsel %vm1580, %v1570, 2102212464
        %v1583 = vsel %vm1579, %v1567, %v1582
        %v1584 = vsel %vm1578, %v1581, %v1583
        %v1585 = vsel %vm1577, %v1564, %v1567
        %v1586 = vsel %vm1580, %v1573, 920167782
        %v1587 = vsel %vm1579, %v1570, %v1586
        %v1588 = vsel %vm1578, %v1585, %v1587
        %v1589 = vsel %vm1577, %v1567, %v1570
        %v1590 = vsel %vm1580, %v1576, 1326507024
        %v1591 = vsel %vm1579, %v1573, %v1590
        %v1592 = vsel %vm1578, %v1589, %v1591
        %v1593 = vshll.u32 %v1553, 8
        %v1594 = vmul.u32.u64.compose %v1593, %v1592
        %v1595 = vextract.low.u32 %v1594
        %v1596 = vextract.high.u32 %v1594
        %v1597 = vmul.u32.u64.compose %v1593, %v1588
        %v1598 = vextract.low.u32 %v1597
        %v1599 = vextract.high.u32 %v1597
        %v1600 = vmul.u32 %v1593, %v1584
        %v1601 = vadd.s32 %v1596, %v1598
        %vm1602 = vc.u32 %v1596, %v1598
        %v1603 = vadd.s32 %v1599, 1
        %v1604 = vsel %vm1602, %v1603, %v1599
        %v1605 = vadd.s32 %v1600, %v1604
        %v1606 = vadd.s32 %v1605, 536870912
        %v1607 = vshrl.u32 %v1606, 30
        %v1608 = vshll.u32 %v1607, 30
        %v1609 = vsub.s32 %v1605, %v1608
        %vm1610 = vcmp.lt.s32.totalorder %v1609, 0
        %v1611 = vsub.s32 0, %v1609
        %v1612 = vsel %vm1610, %v1611, %v1609
        %v1613 = vclz %v1612
        %v1614 = vsub.s32 %v1613, 2
        %vm1615 = vcmp.gt.s32.totalorder 0, %v1614
        %v1616 = vsel %vm1615, 0, %v1614
        %v1617 = vsub.s32 32, %v1616
        %v1618 = vshll.u32 %v1609, %v1616
        %v1619 = vshrl.u32 %v1601, %v1617
        %v1620 = vor.u32 %v1618, %v1619
        %v1621 = vsub.s32 4294967266, %v1616
        %v1622 = vadd.s32 %v1621, 127
        %v1623 = vshll.u32 %v1622, 23
        %v1624 = vor.u32 4788187, %v1623
        %v1625 = vand.u32 2147483647, %v1624
        %v1627 = vcvt.s32.f32 %v1620
        %v1628 = vmul.f32 %v1627, %v1625
        %v1629 = vxor.u32 %v1628, 2147483648
        %v1630 = vsel %vm1547, %v1629, %v1628
        %v1631 = vsub.s32 4, %v1607
        %v1632 = vsel %vm1547, %v1631, %v1607
        %v1633 = vsel %vm1546, %v378, %v1630
        %v1634 = vsel %vm1546, 0, %v1632
        %v1635 = vcosq.f32.pop %v1633
        %v1636 = vsinq.f32.pop %v1633
        %vm1637 = vweird.f32 %v378
        %v1638 = vadd.s32 %v1634, 3
        %v1639 = vand.u32 %v1638, 3
        %vm1640 = vcmp.lt.s32.totalorder %v1639, 2
        %vm1641 = vcmp.eq.s32.totalorder %v1639, 0
        %v1642 = vxor.u32 %v1636, 2147483648
        %v1643 = vsel %vm1641, %v1635, %v1642
        %vm1644 = vcmp.eq.s32.totalorder %v1639, 2
        %v1645 = vxor.u32 %v1635, 2147483648
        %v1646 = vsel %vm1644, %v1645, %v1636
        %v1647 = vsel %vm1640, %v1643, %v1646
        %v1648 = vsel %vm1637, nan, %v1647
        %v1649 = vand.u32 2147483647, %v383
        %vm1650 = vcmp.le.f32.partialorder %v1649, 0.7853982
        %vm1651 = vcmp.lt.s32.totalorder %v383, 0
        %v1652 = vand.u32 %v383, 2139095040
        %v1653 = vshrl.u32 %v1652, 23
        %v1654 = vsub.s32 %v1653, 127
        %v1655 = vand.u32 2147483647, %v383
        %v1656 = vand.u32 %v1655, 8388607
        %v1657 = vor.u32 %v1656, 8388608
        %v1658 = vsub.s32 0, %v1657
        %v1659 = vadd.s32 %v1654, 1
        %vm1660 = vcmp.gt.s32.totalorder %v1659, 0
        %v1661 = vsel %vm1660, %v1659, 0
        %v1662 = vshrl.u32 %v1661, 5
        %v1663 = vand.u32 %v1661, 31
        %v1664 = vsub.s32 32, %v1663
        %v1665 = vshrl.u32 683565275, %v1664
        %v1666 = vshll.u32 683565275, %v1663
        %v1667 = vshrl.u32 2475754826, %v1664
        %v1668 = vor.u32 %v1666, %v1667
        %v1669 = vshll.u32 2475754826, %v1663
        %v1670 = vshrl.u32 2131351028, %v1664
        %v1671 = vor.u32 %v1669, %v1670
        %v1672 = vshll.u32 2131351028, %v1663
        %v1673 = vshrl.u32 2102212464, %v1664
        %v1674 = vor.u32 %v1672, %v1673
        %v1675 = vshll.u32 2102212464, %v1663
        %v1676 = vshrl.u32 920167782, %v1664
        %v1677 = vor.u32 %v1675, %v1676
        %v1678 = vshll.u32 920167782, %v1663
        %v1679 = vshrl.u32 1326507024, %v1664
        %v1680 = vor.u32 %v1678, %v1679
        %vm1681 = vcmp.lt.s32.totalorder %v1662, 1
        %vm1682 = vcmp.lt.s32.totalorder %v1662, 2
        %vm1683 = vcmp.lt.s32.totalorder %v1662, 3
        %vm1684 = vcmp.lt.s32.totalorder %v1662, 4
        %v1685 = vsel %vm1681, %v1665, %v1668
        %v1686 = vsel %vm1684, %v1674, 2102212464
        %v1687 = vsel %vm1683, %v1671, %v1686
        %v1688 = vsel %vm1682, %v1685, %v1687
        %v1689 = vsel %vm1681, %v1668, %v1671
        %v1690 = vsel %vm1684, %v1677, 920167782
        %v1691 = vsel %vm1683, %v1674, %v1690
        %v1692 = vsel %vm1682, %v1689, %v1691
        %v1693 = vsel %vm1681, %v1671, %v1674
        %v1694 = vsel %vm1684, %v1680, 1326507024
        %v1695 = vsel %vm1683, %v1677, %v1694
        %v1696 = vsel %vm1682, %v1693, %v1695
        %v1697 = vshll.u32 %v1657, 8
        %v1698 = vmul.u32.u64.compose %v1697, %v1696
        %v1699 = vextract.low.u32 %v1698
        %v1700 = vextract.high.u32 %v1698
        %v1701 = vmul.u32.u64.compose %v1697, %v1692
        %v1702 = vextract.low.u32 %v1701
        %v1703 = vextract.high.u32 %v1701
        %v1704 = vmul.u32 %v1697, %v1688
        %v1705 = vadd.s32 %v1700, %v1702
        %vm1706 = vc.u32 %v1700, %v1702
        %v1707 = vadd.s32 %v1703, 1
        %v1708 = vsel %vm1706, %v1707, %v1703
        %v1709 = vadd.s32 %v1704, %v1708
        %v1710 = vadd.s32 %v1709, 536870912
        %v1711 = vshrl.u32 %v1710, 30
        %v1712 = vshll.u32 %v1711, 30
        %v1713 = vsub.s32 %v1709, %v1712
        %vm1714 = vcmp.lt.s32.totalorder %v1713, 0
        %v1715 = vsub.s32 0, %v1713
        %v1716 = vsel %vm1714, %v1715, %v1713
        %v1717 = vclz %v1716
        %v1718 = vsub.s32 %v1717, 2
        %vm1719 = vcmp.gt.s32.totalorder 0, %v1718
        %v1720 = vsel %vm1719, 0, %v1718
        %v1721 = vsub.s32 32, %v1720
        %v1722 = vshll.u32 %v1713, %v1720
        %v1723 = vshrl.u32 %v1705, %v1721
        %v1724 = vor.u32 %v1722, %v1723
        %v1725 = vsub.s32 4294967266, %v1720
        %v1726 = vadd.s32 %v1725, 127
        %v1727 = vshll.u32 %v1726, 23
        %v1728 = vor.u32 4788187, %v1727
        %v1729 = vand.u32 2147483647, %v1728
        %v1731 = vcvt.s32.f32 %v1724
        %v1732 = vmul.f32 %v1731, %v1729
        %v1733 = vxor.u32 %v1732, 2147483648
        %v1734 = vsel %vm1651, %v1733, %v1732
        %v1735 = vsub.s32 4, %v1711
        %v1736 = vsel %vm1651, %v1735, %v1711
        %v1737 = vsel %vm1650, %v383, %v1734
        %v1738 = vsel %vm1650, 0, %v1736
        %v1739 = vcosq.f32.pop %v1737
        %v1740 = vsinq.f32.pop %v1737
        %vm1741 = vweird.f32 %v383
        %v1742 = vadd.s32 %v1738, 3
        %v1743 = vand.u32 %v1742, 3
        %vm1744 = vcmp.lt.s32.totalorder %v1743, 2
        %vm1745 = vcmp.eq.s32.totalorder %v1743, 0
        %v1746 = vxor.u32 %v1740, 2147483648
        %v1747 = vsel %vm1745, %v1739, %v1746
        %vm1748 = vcmp.eq.s32.totalorder %v1743, 2
        %v1749 = vxor.u32 %v1739, 2147483648
        %v1750 = vsel %vm1748, %v1749, %v1740
        %v1751 = vsel %vm1744, %v1747, %v1750
        %v1752 = vsel %vm1741, nan, %v1751
        %v1753 = vand.u32 2147483647, %v388
        %vm1754 = vcmp.le.f32.partialorder %v1753, 0.7853982
        %vm1755 = vcmp.lt.s32.totalorder %v388, 0
        %v1756 = vand.u32 %v388, 2139095040
        %v1757 = vshrl.u32 %v1756, 23
        %v1758 = vsub.s32 %v1757, 127
        %v1759 = vand.u32 2147483647, %v388
        %v1760 = vand.u32 %v1759, 8388607
        %v1761 = vor.u32 %v1760, 8388608
        %v1762 = vsub.s32 0, %v1761
        %v1763 = vadd.s32 %v1758, 1
        %vm1764 = vcmp.gt.s32.totalorder %v1763, 0
        %v1765 = vsel %vm1764, %v1763, 0
        %v1766 = vshrl.u32 %v1765, 5
        %v1767 = vand.u32 %v1765, 31
        %v1768 = vsub.s32 32, %v1767
        %v1769 = vshrl.u32 683565275, %v1768
        %v1770 = vshll.u32 683565275, %v1767
        %v1771 = vshrl.u32 2475754826, %v1768
        %v1772 = vor.u32 %v1770, %v1771
        %v1773 = vshll.u32 2475754826, %v1767
        %v1774 = vshrl.u32 2131351028, %v1768
        %v1775 = vor.u32 %v1773, %v1774
        %v1776 = vshll.u32 2131351028, %v1767
        %v1777 = vshrl.u32 2102212464, %v1768
        %v1778 = vor.u32 %v1776, %v1777
        %v1779 = vshll.u32 2102212464, %v1767
        %v1780 = vshrl.u32 920167782, %v1768
        %v1781 = vor.u32 %v1779, %v1780
        %v1782 = vshll.u32 920167782, %v1767
        %v1783 = vshrl.u32 1326507024, %v1768
        %v1784 = vor.u32 %v1782, %v1783
        %vm1785 = vcmp.lt.s32.totalorder %v1766, 1
        %vm1786 = vcmp.lt.s32.totalorder %v1766, 2
        %vm1787 = vcmp.lt.s32.totalorder %v1766, 3
        %vm1788 = vcmp.lt.s32.totalorder %v1766, 4
        %v1789 = vsel %vm1785, %v1769, %v1772
        %v1790 = vsel %vm1788, %v1778, 2102212464
        %v1791 = vsel %vm1787, %v1775, %v1790
        %v1792 = vsel %vm1786, %v1789, %v1791
        %v1793 = vsel %vm1785, %v1772, %v1775
        %v1794 = vsel %vm1788, %v1781, 920167782
        %v1795 = vsel %vm1787, %v1778, %v1794
        %v1796 = vsel %vm1786, %v1793, %v1795
        %v1797 = vsel %vm1785, %v1775, %v1778
        %v1798 = vsel %vm1788, %v1784, 1326507024
        %v1799 = vsel %vm1787, %v1781, %v1798
        %v1800 = vsel %vm1786, %v1797, %v1799
        %v1801 = vshll.u32 %v1761, 8
        %v1802 = vmul.u32.u64.compose %v1801, %v1800
        %v1803 = vextract.low.u32 %v1802
        %v1804 = vextract.high.u32 %v1802
        %v1805 = vmul.u32.u64.compose %v1801, %v1796
        %v1806 = vextract.low.u32 %v1805
        %v1807 = vextract.high.u32 %v1805
        %v1808 = vmul.u32 %v1801, %v1792
        %v1809 = vadd.s32 %v1804, %v1806
        %vm1810 = vc.u32 %v1804, %v1806
        %v1811 = vadd.s32 %v1807, 1
        %v1812 = vsel %vm1810, %v1811, %v1807
        %v1813 = vadd.s32 %v1808, %v1812
        %v1814 = vadd.s32 %v1813, 536870912
        %v1815 = vshrl.u32 %v1814, 30
        %v1816 = vshll.u32 %v1815, 30
        %v1817 = vsub.s32 %v1813, %v1816
        %vm1818 = vcmp.lt.s32.totalorder %v1817, 0
        %v1819 = vsub.s32 0, %v1817
        %v1820 = vsel %vm1818, %v1819, %v1817
        %v1821 = vclz %v1820
        %v1822 = vsub.s32 %v1821, 2
        %vm1823 = vcmp.gt.s32.totalorder 0, %v1822
        %v1824 = vsel %vm1823, 0, %v1822
        %v1825 = vsub.s32 32, %v1824
        %v1826 = vshll.u32 %v1817, %v1824
        %v1827 = vshrl.u32 %v1809, %v1825
        %v1828 = vor.u32 %v1826, %v1827
        %v1829 = vsub.s32 4294967266, %v1824
        %v1830 = vadd.s32 %v1829, 127
        %v1831 = vshll.u32 %v1830, 23
        %v1832 = vor.u32 4788187, %v1831
        %v1833 = vand.u32 2147483647, %v1832
        %v1835 = vcvt.s32.f32 %v1828
        %v1836 = vmul.f32 %v1835, %v1833
        %v1837 = vxor.u32 %v1836, 2147483648
        %v1838 = vsel %vm1755, %v1837, %v1836
        %v1839 = vsub.s32 4, %v1815
        %v1840 = vsel %vm1755, %v1839, %v1815
        %v1841 = vsel %vm1754, %v388, %v1838
        %v1842 = vsel %vm1754, 0, %v1840
        %v1843 = vcosq.f32.pop %v1841
        %v1844 = vsinq.f32.pop %v1841
        %vm1845 = vweird.f32 %v388
        %v1846 = vadd.s32 %v1842, 3
        %v1847 = vand.u32 %v1846, 3
        %vm1848 = vcmp.lt.s32.totalorder %v1847, 2
        %vm1849 = vcmp.eq.s32.totalorder %v1847, 0
        %v1850 = vxor.u32 %v1844, 2147483648
        %v1851 = vsel %vm1849, %v1843, %v1850
        %vm1852 = vcmp.eq.s32.totalorder %v1847, 2
        %v1853 = vxor.u32 %v1843, 2147483648
        %v1854 = vsel %vm1852, %v1853, %v1844
        %v1855 = vsel %vm1848, %v1851, %v1854
        %v1856 = vsel %vm1845, nan, %v1855
        %v1857 = vand.u32 2147483647, %v393
        %vm1858 = vcmp.le.f32.partialorder %v1857, 0.7853982
        %vm1859 = vcmp.lt.s32.totalorder %v393, 0
        %v1860 = vand.u32 %v393, 2139095040
        %v1861 = vshrl.u32 %v1860, 23
        %v1862 = vsub.s32 %v1861, 127
        %v1863 = vand.u32 2147483647, %v393
        %v1864 = vand.u32 %v1863, 8388607
        %v1865 = vor.u32 %v1864, 8388608
        %v1866 = vsub.s32 0, %v1865
        %v1867 = vadd.s32 %v1862, 1
        %vm1868 = vcmp.gt.s32.totalorder %v1867, 0
        %v1869 = vsel %vm1868, %v1867, 0
        %v1870 = vshrl.u32 %v1869, 5
        %v1871 = vand.u32 %v1869, 31
        %v1872 = vsub.s32 32, %v1871
        %v1873 = vshrl.u32 683565275, %v1872
        %v1874 = vshll.u32 683565275, %v1871
        %v1875 = vshrl.u32 2475754826, %v1872
        %v1876 = vor.u32 %v1874, %v1875
        %v1877 = vshll.u32 2475754826, %v1871
        %v1878 = vshrl.u32 2131351028, %v1872
        %v1879 = vor.u32 %v1877, %v1878
        %v1880 = vshll.u32 2131351028, %v1871
        %v1881 = vshrl.u32 2102212464, %v1872
        %v1882 = vor.u32 %v1880, %v1881
        %v1883 = vshll.u32 2102212464, %v1871
        %v1884 = vshrl.u32 920167782, %v1872
        %v1885 = vor.u32 %v1883, %v1884
        %v1886 = vshll.u32 920167782, %v1871
        %v1887 = vshrl.u32 1326507024, %v1872
        %v1888 = vor.u32 %v1886, %v1887
        %vm1889 = vcmp.lt.s32.totalorder %v1870, 1
        %vm1890 = vcmp.lt.s32.totalorder %v1870, 2
        %vm1891 = vcmp.lt.s32.totalorder %v1870, 3
        %vm1892 = vcmp.lt.s32.totalorder %v1870, 4
        %v1893 = vsel %vm1889, %v1873, %v1876
        %v1894 = vsel %vm1892, %v1882, 2102212464
        %v1895 = vsel %vm1891, %v1879, %v1894
        %v1896 = vsel %vm1890, %v1893, %v1895
        %v1897 = vsel %vm1889, %v1876, %v1879
        %v1898 = vsel %vm1892, %v1885, 920167782
        %v1899 = vsel %vm1891, %v1882, %v1898
        %v1900 = vsel %vm1890, %v1897, %v1899
        %v1901 = vsel %vm1889, %v1879, %v1882
        %v1902 = vsel %vm1892, %v1888, 1326507024
        %v1903 = vsel %vm1891, %v1885, %v1902
        %v1904 = vsel %vm1890, %v1901, %v1903
        %v1905 = vshll.u32 %v1865, 8
        %v1906 = vmul.u32.u64.compose %v1905, %v1904
        %v1907 = vextract.low.u32 %v1906
        %v1908 = vextract.high.u32 %v1906
        %v1909 = vmul.u32.u64.compose %v1905, %v1900
        %v1910 = vextract.low.u32 %v1909
        %v1911 = vextract.high.u32 %v1909
        %v1912 = vmul.u32 %v1905, %v1896
        %v1913 = vadd.s32 %v1908, %v1910
        %vm1914 = vc.u32 %v1908, %v1910
        %v1915 = vadd.s32 %v1911, 1
        %v1916 = vsel %vm1914, %v1915, %v1911
        %v1917 = vadd.s32 %v1912, %v1916
        %v1918 = vadd.s32 %v1917, 536870912
        %v1919 = vshrl.u32 %v1918, 30
        %v1920 = vshll.u32 %v1919, 30
        %v1921 = vsub.s32 %v1917, %v1920
        %vm1922 = vcmp.lt.s32.totalorder %v1921, 0
        %v1923 = vsub.s32 0, %v1921
        %v1924 = vsel %vm1922, %v1923, %v1921
        %v1925 = vclz %v1924
        %v1926 = vsub.s32 %v1925, 2
        %vm1927 = vcmp.gt.s32.totalorder 0, %v1926
        %v1928 = vsel %vm1927, 0, %v1926
        %v1929 = vsub.s32 32, %v1928
        %v1930 = vshll.u32 %v1921, %v1928
        %v1931 = vshrl.u32 %v1913, %v1929
        %v1932 = vor.u32 %v1930, %v1931
        %v1933 = vsub.s32 4294967266, %v1928
        %v1934 = vadd.s32 %v1933, 127
        %v1935 = vshll.u32 %v1934, 23
        %v1936 = vor.u32 4788187, %v1935
        %v1937 = vand.u32 2147483647, %v1936
        %v1939 = vcvt.s32.f32 %v1932
        %v1940 = vmul.f32 %v1939, %v1937
        %v1941 = vxor.u32 %v1940, 2147483648
        %v1942 = vsel %vm1859, %v1941, %v1940
        %v1943 = vsub.s32 4, %v1919
        %v1944 = vsel %vm1859, %v1943, %v1919
        %v1945 = vsel %vm1858, %v393, %v1942
        %v1946 = vsel %vm1858, 0, %v1944
        %v1947 = vcosq.f32.pop %v1945
        %v1948 = vsinq.f32.pop %v1945
        %vm1949 = vweird.f32 %v393
        %v1950 = vadd.s32 %v1946, 3
        %v1951 = vand.u32 %v1950, 3
        %vm1952 = vcmp.lt.s32.totalorder %v1951, 2
        %vm1953 = vcmp.eq.s32.totalorder %v1951, 0
        %v1954 = vxor.u32 %v1948, 2147483648
        %v1955 = vsel %vm1953, %v1947, %v1954
        %vm1956 = vcmp.eq.s32.totalorder %v1951, 2
        %v1957 = vxor.u32 %v1947, 2147483648
        %v1958 = vsel %vm1956, %v1957, %v1948
        %v1959 = vsel %vm1952, %v1955, %v1958
        %v1960 = vsel %vm1949, nan, %v1959
        %v1961 = vand.u32 2147483647, %v398
        %vm1962 = vcmp.le.f32.partialorder %v1961, 0.7853982
        %vm1963 = vcmp.lt.s32.totalorder %v398, 0
        %v1964 = vand.u32 %v398, 2139095040
        %v1965 = vshrl.u32 %v1964, 23
        %v1966 = vsub.s32 %v1965, 127
        %v1967 = vand.u32 2147483647, %v398
        %v1968 = vand.u32 %v1967, 8388607
        %v1969 = vor.u32 %v1968, 8388608
        %v1970 = vsub.s32 0, %v1969
        %v1971 = vadd.s32 %v1966, 1
        %vm1972 = vcmp.gt.s32.totalorder %v1971, 0
        %v1973 = vsel %vm1972, %v1971, 0
        %v1974 = vshrl.u32 %v1973, 5
        %v1975 = vand.u32 %v1973, 31
        %v1976 = vsub.s32 32, %v1975
        %v1977 = vshrl.u32 683565275, %v1976
        %v1978 = vshll.u32 683565275, %v1975
        %v1979 = vshrl.u32 2475754826, %v1976
        %v1980 = vor.u32 %v1978, %v1979
        %v1981 = vshll.u32 2475754826, %v1975
        %v1982 = vshrl.u32 2131351028, %v1976
        %v1983 = vor.u32 %v1981, %v1982
        %v1984 = vshll.u32 2131351028, %v1975
        %v1985 = vshrl.u32 2102212464, %v1976
        %v1986 = vor.u32 %v1984, %v1985
        %v1987 = vshll.u32 2102212464, %v1975
        %v1988 = vshrl.u32 920167782, %v1976
        %v1989 = vor.u32 %v1987, %v1988
        %v1990 = vshll.u32 920167782, %v1975
        %v1991 = vshrl.u32 1326507024, %v1976
        %v1992 = vor.u32 %v1990, %v1991
        %vm1993 = vcmp.lt.s32.totalorder %v1974, 1
        %vm1994 = vcmp.lt.s32.totalorder %v1974, 2
        %vm1995 = vcmp.lt.s32.totalorder %v1974, 3
        %vm1996 = vcmp.lt.s32.totalorder %v1974, 4
        %v1997 = vsel %vm1993, %v1977, %v1980
        %v1998 = vsel %vm1996, %v1986, 2102212464
        %v1999 = vsel %vm1995, %v1983, %v1998
        %v2000 = vsel %vm1994, %v1997, %v1999
        %v2001 = vsel %vm1993, %v1980, %v1983
        %v2002 = vsel %vm1996, %v1989, 920167782
        %v2003 = vsel %vm1995, %v1986, %v2002
        %v2004 = vsel %vm1994, %v2001, %v2003
        %v2005 = vsel %vm1993, %v1983, %v1986
        %v2006 = vsel %vm1996, %v1992, 1326507024
        %v2007 = vsel %vm1995, %v1989, %v2006
        %v2008 = vsel %vm1994, %v2005, %v2007
        %v2009 = vshll.u32 %v1969, 8
        %v2010 = vmul.u32.u64.compose %v2009, %v2008
        %v2011 = vextract.low.u32 %v2010
        %v2012 = vextract.high.u32 %v2010
        %v2013 = vmul.u32.u64.compose %v2009, %v2004
        %v2014 = vextract.low.u32 %v2013
        %v2015 = vextract.high.u32 %v2013
        %v2016 = vmul.u32 %v2009, %v2000
        %v2017 = vadd.s32 %v2012, %v2014
        %vm2018 = vc.u32 %v2012, %v2014
        %v2019 = vadd.s32 %v2015, 1
        %v2020 = vsel %vm2018, %v2019, %v2015
        %v2021 = vadd.s32 %v2016, %v2020
        %v2022 = vadd.s32 %v2021, 536870912
        %v2023 = vshrl.u32 %v2022, 30
        %v2024 = vshll.u32 %v2023, 30
        %v2025 = vsub.s32 %v2021, %v2024
        %vm2026 = vcmp.lt.s32.totalorder %v2025, 0
        %v2027 = vsub.s32 0, %v2025
        %v2028 = vsel %vm2026, %v2027, %v2025
        %v2029 = vclz %v2028
        %v2030 = vsub.s32 %v2029, 2
        %vm2031 = vcmp.gt.s32.totalorder 0, %v2030
        %v2032 = vsel %vm2031, 0, %v2030
        %v2033 = vsub.s32 32, %v2032
        %v2034 = vshll.u32 %v2025, %v2032
        %v2035 = vshrl.u32 %v2017, %v2033
        %v2036 = vor.u32 %v2034, %v2035
        %v2037 = vsub.s32 4294967266, %v2032
        %v2038 = vadd.s32 %v2037, 127
        %v2039 = vshll.u32 %v2038, 23
        %v2040 = vor.u32 4788187, %v2039
        %v2041 = vand.u32 2147483647, %v2040
        %v2043 = vcvt.s32.f32 %v2036
        %v2044 = vmul.f32 %v2043, %v2041
        %v2045 = vxor.u32 %v2044, 2147483648
        %v2046 = vsel %vm1963, %v2045, %v2044
        %v2047 = vsub.s32 4, %v2023
        %v2048 = vsel %vm1963, %v2047, %v2023
        %v2049 = vsel %vm1962, %v398, %v2046
        %v2050 = vsel %vm1962, 0, %v2048
        %v2051 = vcosq.f32.pop %v2049
        %v2052 = vsinq.f32.pop %v2049
        %vm2053 = vweird.f32 %v398
        %v2054 = vadd.s32 %v2050, 3
        %v2055 = vand.u32 %v2054, 3
        %vm2056 = vcmp.lt.s32.totalorder %v2055, 2
        %vm2057 = vcmp.eq.s32.totalorder %v2055, 0
        %v2058 = vxor.u32 %v2052, 2147483648
        %v2059 = vsel %vm2057, %v2051, %v2058
        %vm2060 = vcmp.eq.s32.totalorder %v2055, 2
        %v2061 = vxor.u32 %v2051, 2147483648
        %v2062 = vsel %vm2060, %v2061, %v2052
        %v2063 = vsel %vm2056, %v2059, %v2062
        %v2064 = vsel %vm2053, nan, %v2063
        %2065 = vst [vmem:[%s171] sm:$0xff] %v504
        %2066 = vst [vmem:[%s171 + $0x8] sm:$0xff] %v608
        %2067 = vst [vmem:[%s171 + $0x10] sm:$0xff] %v712
        %2068 = vst [vmem:[%s171 + $0x18] sm:$0xff] %v816
        %2069 = vst [vmem:[%s171 + $0x20] sm:$0xff] %v920
        %2070 = vst [vmem:[%s171 + $0x28] sm:$0xff] %v1024
        %2071 = vst [vmem:[%s171 + $0x30] sm:$0xff] %v1128
        %2072 = vst [vmem:[%s171 + $0x38] sm:$0xff] %v1232
        %2073 = vst [vmem:[%s171 + $0x40] sm:$0xff] %v1336
        %2074 = vst [vmem:[%s171 + $0x48] sm:$0xff] %v1440
        %2075 = vst [vmem:[%s171 + $0x50] sm:$0xff] %v1544
        %2076 = vst [vmem:[%s171 + $0x58] sm:$0xff] %v1648
        %2077 = vst [vmem:[%s171 + $0x60] sm:$0xff] %v1752
        %2078 = vst [vmem:[%s171 + $0x68] sm:$0xff] %v1856
        %2079 = vst [vmem:[%s171 + $0x70] sm:$0xff] %v1960
        %2080 = vst [vmem:[%s171 + $0x78] sm:$0xff] %v2064
        %s2081 = sand.u32 %s75, 1
        %s2082 = scalar_lea.sflag [#allocation4], %s2081
        %s2083 = sand.u32 %s75, 1
        %s2084 = smul.addr %s2083, 128
        %s2085 = scalar_lea.vmem [#allocation7], %s2084
        // Predicated region
        $region37: #{tpu_custom_call.1} parent=27 // pred_check
          %p2086 = pneg %p85
        $region38: #{tpu_custom_call.1} parent=27 // pred_check_branch
          %2088 = sbr.rel (%p2086) target = $region40
        $region39: #{tpu_custom_call.1} parent=27 // pred_region
          %s2089 = smul.u32 16, %s20
          %s2091 = ssub.s32 2048, 2048
          %2092 = vsyncadd %s2082, %s2091
          %s2093 = smul.addr %s2089, 128
          %s2094 = scalar_lea.hbm %s2, %s2093
          %s2095 = sshll.u32 %s2085, 4
          %s2096 = int_to_ptr.vmem [resolvable:$true] %s2095
          %2101 = dma.vmem_to_hbm [thread:$0]  %s2096, 2048, %s2094, %s2082, 128, 128, 8
        $region40: #{tpu_custom_call.1} parent=27 // pred_fallthru
          _
      $region28: #{tpu_custom_call.1} parent=5 // pred_fallthru
        _
      %p2102 = scmp.le.s32.totalorder 2, %s15
      // Predicated region
      $region41: #{tpu_custom_call.1} parent=5 // pred_check
        %p2103 = pneg %p2102
      $region42: #{tpu_custom_call.1} parent=5 // pred_check_branch
        %2105 = sbr.rel (%p2103) target = $region44
      $region43: #{tpu_custom_call.1} parent=5 // pred_region
        %s2106 = ssub.s32 %s15, 2
        // Predicated region
        $region45: #{tpu_custom_call.1} parent=43 // pred_check
          %p2107 = pneg %p91
        $region46: #{tpu_custom_call.1} parent=43 // pred_check_branch
          %2109 = sbr.rel (%p2107) target = $region48
        $region47: #{tpu_custom_call.1} parent=43 // pred_region
          %s2110 = sand.u32 %s76, 1
          %s2111 = scalar_lea.sflag [#allocation4], %s2110
          %s2112 = sand.u32 %s76, 1
          %s2113 = smul.addr %s2112, 128
          %s2114 = scalar_lea.vmem [#allocation7], %s2113
          %2115 = dma.done %s2111, 2048
        $region48: #{tpu_custom_call.1} parent=43 // pred_fallthru
          _
      $region44: #{tpu_custom_call.1} parent=5 // pred_fallthru
        _
    $region6: #{tpu_custom_call.1} parent=1 // loop_footer
      %s19 = sadd.s32 1, %s15
    $region7: #{tpu_custom_call.1} parent=1 // loop_footer_branch
      %14 = sbr.rel target = $region3
    $region8: #{tpu_custom_call.1} parent=1 // loop_exit
      _
    %2116 = vsyncpa [#allocation3], 1
    %s2117 = scalar_lea.sflag [#allocation3], 1
    %2118 = vsyncpa %s2117, 1
    %2119 = vsyncpa [#allocation6], 1
    %2120 = vsyncpa [#allocation4], 1
    %s2121 = scalar_lea.sflag [#allocation4], 1
    %2122 = vsyncpa %s2121, 1

</llo_original>
